<compile_context>
chip_gen: v5e
topology: v5e:2x2
jax: 0.10.0
libtpu: 0.0.40
codegen_flags: <defaults>
</compile_context>

<pallas_src>
import numpy as np
import jax
import jax.numpy as jnp
from jax import lax
from jax.experimental import pallas as pl
from jax.experimental.pallas import tpu as pltpu


# Logical (PyTorch) hidden sizes and their lane-padded counterparts.
H1, H2, H3 = 400, 300, 200
H1P, H2P, H3P = 512, 384, 256


def _round_up(x, m):
    return ((x + m - 1) // m) * m


# ----------------------------- Pallas kernel ------------------------------ #
def critic_kernel(
    sa_ref,                         # (TB, SAp) f32   [state | action] padded
    wsa_ref, bsa_ref,               # (SAp, 896) bf16, (1, 896) f32  block-diag [W1|Wa]
    w2_ref, b2_ref,                 # (512, 384) bf16, (1, 384) f32
    w3_ref, b3_ref,                 # (768, 256) bf16, (1, 256) f32  stacked [W3_s; W3_a]
    w4_ref,                         # (8, 256) f32   (row vector replicated on sublanes)
    b4_ref,                         # (1, 1) f32 in SMEM
    out_ref,                        # (8, TB) f32    lane-dense q row (sublanes identical)
):
    f32 = jnp.float32
    bf16 = jnp.bfloat16

    # Fused first layer: [h1 | a1] = relu([s|a] @ [[W1,0],[0,Wa]] + [b1|ba])
    h = jnp.dot(sa_ref[...].astype(bf16), wsa_ref[...],
                preferred_element_type=f32) + bsa_ref[...]
    h = jnp.maximum(h, 0.0)
    s1 = h[:, :H1P]                 # (TB, 512)  relu(state @ W1 + b1), lane-padded
    a1 = h[:, H1P:]                 # (TB, 384)  relu(action @ Wa + ba), lane-padded

    # s2 = relu(s1 @ W2 + b2)
    s2 = jnp.dot(s1.astype(bf16), w2_ref[...],
                 preferred_element_type=f32) + b2_ref[...]
    s2 = jnp.maximum(s2, 0.0)

    # x = relu(cat(s2, a1) @ W3 + b3)  -- single K=768 matmul on the stacked W3
    cat = jnp.concatenate([s2.astype(bf16), a1.astype(bf16)], axis=1)  # (TB, 768)
    x = jnp.dot(cat, w3_ref[...], preferred_element_type=f32) + b3_ref[...]
    x = jnp.maximum(x, 0.0)

    # q = x @ w4 + b4, produced directly in lane-dense (8, TB) row layout via a
    # transposed-RHS contraction (w4 replicated across the 8 sublanes).
    q8 = lax.dot_general(w4_ref[...], x,
                         dimension_numbers=(((1,), (1,)), ((), ())),
                         preferred_element_type=f32)                   # (8, TB)
    out_ref[...] = (q8 + b4_ref[0, 0]).astype(out_ref.dtype)


# ------------------------------- wrapper ----------------------------------- #
def critic_forward(state, action, kernel_params, *, block_b=512):
    """state: [B, state_dim], action: [B, action_dim] -> q: [B, 1] (f32)."""
    assert block_b % 128 == 0
    B = state.shape[0]
    wsa, bsa, w2p, b2p, w3p, b3p, w4p, b4 = kernel_params
    SAp = wsa.shape[0]

    # Batch tile selection:
    #  * large B: block_b-sized tiles (multiple of 128, amortizes per-step cost)
    #  * mid B:   exactly two tiles so the "parallel" axis uses both v7x cores
    #  * small B: one tile covering the whole (8-rounded) batch
    if B >= 2 * block_b:
        TB = block_b
    elif B > 256:
        TB = _round_up((B + 1) // 2, 128)
    else:
        TB = _round_up(max(B, 1), 8)
    Bp = _round_up(B, TB)

    sa = jnp.concatenate([state, action], axis=1)
    sa = jnp.pad(sa, ((0, Bp - B), (0, SAp - sa.shape[1])))

    grid = (Bp // TB,)

    def resident(arr):
        # Constant index_map -> DMA'd once, stays VMEM-resident across steps.
        return pl.BlockSpec(arr.shape, lambda i: (0, 0))

    in_specs = [
        pl.BlockSpec((TB, SAp), lambda i: (i, 0)),            # fused [state|action]
        resident(wsa), resident(bsa),
        resident(w2p), resident(b2p),
        resident(w3p), resident(b3p),
        resident(w4p),
        pl.BlockSpec(memory_space=pltpu.MemorySpace.SMEM),    # b4 scalar
    ]

    out = pl.pallas_call(
        critic_kernel,
        out_shape=jax.ShapeDtypeStruct((8, Bp), jnp.float32),
        grid=grid,
        in_specs=in_specs,
        out_specs=pl.BlockSpec((8, TB), lambda i: (0, i)),
        compiler_params=pltpu.CompilerParams(
            dimension_semantics=("parallel",),
            vmem_limit_bytes=40 * 1024 * 1024),
    )(sa, wsa, bsa, w2p, b2p, w3p, b3p, w4p, b4)

    return out[0, :B, None]


# --------------------------- parameter init -------------------------------- #
def fanin_init(key, shape):
    # mirrors torch fanin_init(weight.size()) with size = (out, in); bound uses size[0]
    bound = 1.0 / np.sqrt(shape[0])
    return jax.random.uniform(key, shape, jnp.float32, -bound, bound)


def default_linear_bias(key, in_features, out_features):
    # PyTorch nn.Linear default bias init: U(-1/sqrt(in), 1/sqrt(in))
    bound = 1.0 / np.sqrt(in_features)
    return jax.random.uniform(key, (1, out_features), jnp.float32, -bound, bound)


def make_params(key, state_dim, action_dim, epsilon=0.003):
    """Returns (ref_params, kernel_params).

    ref_params: unpadded f32 [in,out] weights, matches the PyTorch module.
    kernel_params: fused/padded bf16 weights + f32 biases for the kernel.
    Padded lanes/rows are exactly zero, which is inert through matmul + ReLU.
    """
    ks = jax.random.split(key, 10)

    # weights stored PyTorch-style (out, in) for init, then transposed to (in, out)
    w1 = fanin_init(ks[0], (H1, state_dim)).T          # (S, 400)
    b1 = default_linear_bias(ks[1], state_dim, H1)     # (1, 400)
    w2 = fanin_init(ks[2], (H2, H1)).T                 # (400, 300)
    b2 = default_linear_bias(ks[3], H1, H2)            # (1, 300)
    wa = fanin_init(ks[4], (H2, action_dim)).T         # (A, 300)
    ba = default_linear_bias(ks[5], action_dim, H2)    # (1, 300)
    w3 = fanin_init(ks[6], (H3, 2 * H2)).T             # (600, 200)
    b3 = default_linear_bias(ks[7], 2 * H2, H3)        # (1, 200)
    w4 = jax.random.uniform(ks[8], (1, H3), jnp.float32, -epsilon, epsilon).T  # (200, 1)
    b4 = default_linear_bias(ks[9], H3, 1)             # (1, 1)

    ref_params = (w1, b1, w2, b2, wa, ba, w3, b3, w4, b4)

    S, A = state_dim, action_dim
    SAp = max(16, _round_up(S + A, 16))                # bf16 sublane packing

    # Fused block-diagonal first-layer weight [[W1, 0], [0, Wa]] : (SAp, 896)
    wsa = jnp.zeros((SAp, H1P + H2P), jnp.float32)
    wsa = wsa.at[:S, :H1].set(w1)
    wsa = wsa.at[S:S + A, H1P:H1P + H2].set(wa)
    bsa = jnp.zeros((1, H1P + H2P), jnp.float32)
    bsa = bsa.at[:, :H1].set(b1)
    bsa = bsa.at[:, H1P:H1P + H2].set(ba)

    # Layer 2 (512, 384)
    w2p = jnp.zeros((H1P, H2P), jnp.float32).at[:H1, :H2].set(w2)
    b2p = jnp.zeros((1, H2P), jnp.float32).at[:, :H2].set(b2)

    # Layer 3 stacked for cat(s2, a1): (768, 256)
    w3p = jnp.zeros((2 * H2P, H3P), jnp.float32)
    w3p = w3p.at[:H2, :H3].set(w3[:H2])                # s-part rows
    w3p = w3p.at[H2P:H2P + H2, :H3].set(w3[H2:])       # a-part rows
    b3p = jnp.zeros((1, H3P), jnp.float32).at[:, :H3].set(b3)

    # Final layer: row vector replicated across 8 sublanes (kept f32 for accuracy)
    w4p = jnp.zeros((8, H3P), jnp.float32).at[:, :H3].set(
        jnp.broadcast_to(w4.T, (8, H3)))

    bf16 = jnp.bfloat16
    kernel_params = (
        wsa.astype(bf16), bsa,
        w2p.astype(bf16), b2p,
        w3p.astype(bf16), b3p,
        w4p, b4,
    )
    return ref_params, kernel_params


# ------------------------------ reference ---------------------------------- #
def critic_reference(state, action, ref_params):
    (w1, b1, w2, b2, wa, ba, w3, b3, w4, b4) = ref_params
    s = jnp.maximum(state @ w1 + b1, 0.0)
    s = jnp.maximum(s @ w2 + b2, 0.0)
    a = jnp.maximum(action @ wa + ba, 0.0)
    x = jnp.concatenate([s, a], axis=1)
    x = jnp.maximum(x @ w3 + b3, 0.0)
    return x @ w4 + b4


# --------------------------------- main ------------------------------------ #
if __name__ == "__main__":
    key = jax.random.PRNGKey(0)
    k_param, k_state, k_action = jax.random.split(key, 3)

    batch, state_dim, action_dim = 2, 16, 8
    ref_params, kernel_params = make_params(k_param, state_dim, action_dim)

    state = jax.random.normal(k_state, (batch, state_dim), jnp.float32)
    action = jax.random.normal(k_action, (batch, action_dim), jnp.float32)

    out = critic_forward(state, action, kernel_params)
    out = jax.block_until_ready(out)
    assert out.shape == (batch, 1)

    ref = critic_reference(state, action, ref_params)
    # bf16 weights / operands with f32 accumulation -> loosened tolerance.
    np.testing.assert_allclose(np.asarray(out), np.asarray(ref),
                               rtol=5e-2, atol=2e-2)

    print("KERNEL_OK")
</pallas_src>

<mosaic_0001>
module attributes {stable_mosaic.version = 11 : i64} {
  func.func @critic_kernel(%arg0: i32, %arg1: memref<8x32xf32, #tpu.memory_space<vmem>>, %arg2: memref<32x896xbf16, #tpu.memory_space<vmem>>, %arg3: memref<1x896xf32, #tpu.memory_space<vmem>>, %arg4: memref<512x384xbf16, #tpu.memory_space<vmem>>, %arg5: memref<1x384xf32, #tpu.memory_space<vmem>>, %arg6: memref<768x256xbf16, #tpu.memory_space<vmem>>, %arg7: memref<1x256xf32, #tpu.memory_space<vmem>>, %arg8: memref<8x256xf32, #tpu.memory_space<vmem>>, %arg9: memref<1x1xf32, #tpu.memory_space<smem>>, %arg10: memref<8x8xf32, #tpu.memory_space<vmem>>) attributes {dimension_semantics = [#tpu.dimension_semantics<parallel>], iteration_bounds = array<i64: 1>, scalar_prefetch = 0 : i64, scratch_operands = 0 : i64, tpu.core_type = #tpu.core_type<tc>, window_params = [{transform_indices = @transform_0, window_bounds = array<i64: 8, 32>}, {pipeline_mode = #tpu.pipeline_mode<synchronous>, transform_indices = @transform_1, window_bounds = array<i64: 32, 896>}, {pipeline_mode = #tpu.pipeline_mode<synchronous>, transform_indices = @transform_2, window_bounds = array<i64: 1, 896>}, {pipeline_mode = #tpu.pipeline_mode<synchronous>, transform_indices = @transform_3, window_bounds = array<i64: 512, 384>}, {pipeline_mode = #tpu.pipeline_mode<synchronous>, transform_indices = @transform_4, window_bounds = array<i64: 1, 384>}, {pipeline_mode = #tpu.pipeline_mode<synchronous>, transform_indices = @transform_5, window_bounds = array<i64: 768, 256>}, {pipeline_mode = #tpu.pipeline_mode<synchronous>, transform_indices = @transform_6, window_bounds = array<i64: 1, 256>}, {pipeline_mode = #tpu.pipeline_mode<synchronous>, transform_indices = @transform_7, window_bounds = array<i64: 8, 256>}, {transform_indices = @transform_8, window_bounds = array<i64: 1, 1>}, {transform_indices = @transform_9, window_bounds = array<i64: 8, 8>}]} {
    %c0 = arith.constant 0 : index
    %c0_0 = arith.constant 0 : index
    %0 = vector.load %arg1[%c0, %c0_0] : memref<8x32xf32, #tpu.memory_space<vmem>>, vector<8x32xf32>
    %1 = arith.truncf %0 : vector<8x32xf32> to vector<8x32xbf16>
    %c0_1 = arith.constant 0 : index
    %c0_2 = arith.constant 0 : index
    %2 = vector.load %arg2[%c0_1, %c0_2] : memref<32x896xbf16, #tpu.memory_space<vmem>>, vector<32x896xbf16>
    %cst = arith.constant dense<0.000000e+00> : vector<8x896xf32>
    %3 = tpu.matmul %1, %2, %cst {dimension_numbers = #tpu.dot_dimension_numbers<[1], [0], [0], [1], [0, 0, 1, 1], [], []>} : vector<8x32xbf16>, vector<32x896xbf16>, vector<8x896xf32> -> vector<8x896xf32>
    %c0_3 = arith.constant 0 : index
    %c0_4 = arith.constant 0 : index
    %4 = vector.load %arg3[%c0_3, %c0_4] : memref<1x896xf32, #tpu.memory_space<vmem>>, vector<1x896xf32>
    %5 = vector.broadcast %4 : vector<1x896xf32> to vector<8x896xf32>
    %6 = arith.addf %3, %5 : vector<8x896xf32>
    %cst_5 = arith.constant 0.000000e+00 : f32
    %7 = vector.broadcast %cst_5 : f32 to vector<8x896xf32>
    %8 = arith.maximumf %6, %7 : vector<8x896xf32>
    %9 = vector.extract_strided_slice %8 {offsets = [0, 0], sizes = [8, 512], strides = [1, 1]} : vector<8x896xf32> to vector<8x512xf32>
    %10 = vector.extract_strided_slice %8 {offsets = [0, 512], sizes = [8, 384], strides = [1, 1]} : vector<8x896xf32> to vector<8x384xf32>
    %11 = arith.truncf %9 : vector<8x512xf32> to vector<8x512xbf16>
    %c0_6 = arith.constant 0 : index
    %c0_7 = arith.constant 0 : index
    %12 = vector.load %arg4[%c0_6, %c0_7] : memref<512x384xbf16, #tpu.memory_space<vmem>>, vector<512x384xbf16>
    %cst_8 = arith.constant dense<0.000000e+00> : vector<8x384xf32>
    %13 = tpu.matmul %11, %12, %cst_8 {dimension_numbers = #tpu.dot_dimension_numbers<[1], [0], [0], [1], [0, 0, 1, 1], [], []>} : vector<8x512xbf16>, vector<512x384xbf16>, vector<8x384xf32> -> vector<8x384xf32>
    %c0_9 = arith.constant 0 : index
    %c0_10 = arith.constant 0 : index
    %14 = vector.load %arg5[%c0_9, %c0_10] : memref<1x384xf32, #tpu.memory_space<vmem>>, vector<1x384xf32>
    %15 = vector.broadcast %14 : vector<1x384xf32> to vector<8x384xf32>
    %16 = arith.addf %13, %15 : vector<8x384xf32>
    %cst_11 = arith.constant 0.000000e+00 : f32
    %17 = vector.broadcast %cst_11 : f32 to vector<8x384xf32>
    %18 = arith.maximumf %16, %17 : vector<8x384xf32>
    %19 = arith.truncf %18 : vector<8x384xf32> to vector<8x384xbf16>
    %20 = arith.truncf %10 : vector<8x384xf32> to vector<8x384xbf16>
    %21 = tpu.concatenate %19, %20 in 1 : vector<8x384xbf16>, vector<8x384xbf16> -> vector<8x768xbf16>
    %c0_12 = arith.constant 0 : index
    %c0_13 = arith.constant 0 : index
    %22 = vector.load %arg6[%c0_12, %c0_13] : memref<768x256xbf16, #tpu.memory_space<vmem>>, vector<768x256xbf16>
    %cst_14 = arith.constant dense<0.000000e+00> : vector<8x256xf32>
    %23 = tpu.matmul %21, %22, %cst_14 {dimension_numbers = #tpu.dot_dimension_numbers<[1], [0], [0], [1], [0, 0, 1, 1], [], []>} : vector<8x768xbf16>, vector<768x256xbf16>, vector<8x256xf32> -> vector<8x256xf32>
    %c0_15 = arith.constant 0 : index
    %c0_16 = arith.constant 0 : index
    %24 = vector.load %arg7[%c0_15, %c0_16] : memref<1x256xf32, #tpu.memory_space<vmem>>, vector<1x256xf32>
    %25 = vector.broadcast %24 : vector<1x256xf32> to vector<8x256xf32>
    %26 = arith.addf %23, %25 : vector<8x256xf32>
    %cst_17 = arith.constant 0.000000e+00 : f32
    %27 = vector.broadcast %cst_17 : f32 to vector<8x256xf32>
    %28 = arith.maximumf %26, %27 : vector<8x256xf32>
    %c0_18 = arith.constant 0 : index
    %c0_19 = arith.constant 0 : index
    %29 = vector.load %arg8[%c0_18, %c0_19] : memref<8x256xf32, #tpu.memory_space<vmem>>, vector<8x256xf32>
    %cst_20 = arith.constant dense<0.000000e+00> : vector<8x8xf32>
    %30 = tpu.matmul %29, %28, %cst_20 {dimension_numbers = #tpu.dot_dimension_numbers<[1], [1], [0], [0], [0, 0, 1, 0], [], []>} : vector<8x256xf32>, vector<8x256xf32>, vector<8x8xf32> -> vector<8x8xf32>
    %c0_21 = arith.constant 0 : index
    %c0_22 = arith.constant 0 : index
    %31 = memref.load %arg9[%c0_21, %c0_22] : memref<1x1xf32, #tpu.memory_space<smem>>
    %32 = vector.broadcast %31 : f32 to vector<8x8xf32>
    %33 = arith.addf %30, %32 : vector<8x8xf32>
    %c0_23 = arith.constant 0 : index
    %c0_24 = arith.constant 0 : index
    %34 = vector.load %arg10[%c0_23, %c0_24] : memref<8x8xf32, #tpu.memory_space<vmem>>, vector<8x8xf32>
    tpu.vector_store %arg10[%c0_23, %c0_24], %33 {strides = array<i32>} : memref<8x8xf32, #tpu.memory_space<vmem>>, vector<8x8xf32>,
    return
  }
  func.func @transform_0(%arg0: i32) -> (i32, i32) {
    %c0_i32 = arith.constant 0 : i32
    %c0_i32_0 = arith.constant 0 : i32
    return %arg0, %c0_i32 : i32, i32
  }
  func.func @transform_1(%arg0: i32) -> (i32, i32) {
    %c0_i32 = arith.constant 0 : i32
    %c0_i32_0 = arith.constant 0 : i32
    %c0_i32_1 = arith.constant 0 : i32
    return %c0_i32, %c0_i32_0 : i32, i32
  }
  func.func @transform_2(%arg0: i32) -> (i32, i32) {
    %c0_i32 = arith.constant 0 : i32
    %c0_i32_0 = arith.constant 0 : i32
    %c0_i32_1 = arith.constant 0 : i32
    return %c0_i32, %c0_i32_0 : i32, i32
  }
  func.func @transform_3(%arg0: i32) -> (i32, i32) {
    %c0_i32 = arith.constant 0 : i32
    %c0_i32_0 = arith.constant 0 : i32
    %c0_i32_1 = arith.constant 0 : i32
    return %c0_i32, %c0_i32_0 : i32, i32
  }
  func.func @transform_4(%arg0: i32) -> (i32, i32) {
    %c0_i32 = arith.constant 0 : i32
    %c0_i32_0 = arith.constant 0 : i32
    %c0_i32_1 = arith.constant 0 : i32
    return %c0_i32, %c0_i32_0 : i32, i32
  }
  func.func @transform_5(%arg0: i32) -> (i32, i32) {
    %c0_i32 = arith.constant 0 : i32
    %c0_i32_0 = arith.constant 0 : i32
    %c0_i32_1 = arith.constant 0 : i32
    return %c0_i32, %c0_i32_0 : i32, i32
  }
  func.func @transform_6(%arg0: i32) -> (i32, i32) {
    %c0_i32 = arith.constant 0 : i32
    %c0_i32_0 = arith.constant 0 : i32
    %c0_i32_1 = arith.constant 0 : i32
    return %c0_i32, %c0_i32_0 : i32, i32
  }
  func.func @transform_7(%arg0: i32) -> (i32, i32) {
    %c0_i32 = arith.constant 0 : i32
    %c0_i32_0 = arith.constant 0 : i32
    %c0_i32_1 = arith.constant 0 : i32
    return %c0_i32, %c0_i32_0 : i32, i32
  }
  func.func @transform_8(%arg0: i32) -> (i32, i32) {
    %c0_i32 = arith.constant 0 : i32
    %c0_i32_0 = arith.constant 0 : i32
    %c0_i32_1 = arith.constant 0 : i32
    return %c0_i32, %c0_i32_0 : i32, i32
  }
  func.func @transform_9(%arg0: i32) -> (i32, i32) {
    %c0_i32 = arith.constant 0 : i32
    %c0_i32_0 = arith.constant 0 : i32
    return %c0_i32, %arg0 : i32, i32
  }
}

</mosaic_0001>

<llo_original>
// kernel: tpu_custom_call.1
$region0: #{tpu_custom_call.1}
  #allocation0 [shape = 'u32[]', space=smem, size = 0x4, offset = 0x4, fixed_abs, tag = 'smem constant byte address 0x4 - core index']
  #allocation1 [shape = 'u32[72,128]{1,0:T(1,128)}', space=vmem, size = 0x9000, scoped, tag = 'internal scratch']
  #allocation2 [shape = 'f32[1,1]{1,0:T(1,128)S(6)}', space=smem, size = 0x200, scoped, tag = 'scoped memory for tpu_custom_call.1']
  %s0 = inlined_call_operand.hbm [shape: f32[8,32], index: 0, kind: input, shape index: {}]
  %s1 = inlined_call_operand.hbm [shape: bf16[32,896], index: 1, kind: input, shape index: {}]
  %s2 = inlined_call_operand.hbm [shape: f32[1,896], index: 2, kind: input, shape index: {}]
  %s3 = inlined_call_operand.hbm [shape: bf16[512,384], index: 3, kind: input, shape index: {}]
  %s4 = inlined_call_operand.vmem [shape: f32[1,384], index: 4, kind: input, shape index: {}]
  %s5 = inlined_call_operand.hbm [shape: bf16[768,256], index: 5, kind: input, shape index: {}]
  %s6 = inlined_call_operand.vmem [shape: f32[1,256], index: 6, kind: input, shape index: {}]
  %s7 = inlined_call_operand.hbm [shape: f32[8,256], index: 7, kind: input, shape index: {}]
  %s8 = inlined_call_operand.<no memory space> [shape: f32[1,1], index: 8, kind: input, shape index: {}]
  %s9 = inlined_call_operand.hbm [shape: f32[8,8], index: 9, kind: output, shape index: {}]
  %s10 = sld [smem:[#allocation0]]
  $region70: #{tpu_custom_call.1} parent=0
    _
  %s12 = ssub.s32 1, %s10
  %s13 = scalar_select 0, %s12, %s10
  %14 = sst [smem:[#allocation2]] %s8
  $region1: #{tpu_custom_call.1} parent=0
    #allocation3 [shape = 'u8[4096]{0}', space=vmem, size = 0x1000, scoped, tag = 'input window, operand 0, single buffered']
    #allocation4 [shape = 's32[1]{0}', space=sflag, size = 0x4, scoped, tag = 'scoped memory for tpu_custom_call.1']
    #allocation5 [shape = 's32[1]{0}', space=sflag, size = 0x4, scoped, tag = 'scoped memory for tpu_custom_call.1']
    #allocation6 [shape = 'u8[57344]{0}', space=vmem, size = 0xe000, scoped, tag = 'input window, operand 1, single buffered']
    #allocation7 [shape = 's32[1]{0}', space=sflag, size = 0x4, scoped, tag = 'scoped memory for tpu_custom_call.1']
    #allocation8 [shape = 'u8[3584]{0}', space=vmem, size = 0x1000, scoped, tag = 'input window, operand 2, single buffered']
    #allocation9 [shape = 'u8[393216]{0}', space=vmem, size = 0x60000, scoped, tag = 'input window, operand 3, single buffered']
    #allocation10 [shape = 's32[1]{0}', space=sflag, size = 0x4, scoped, tag = 'scoped memory for tpu_custom_call.1']
    #allocation11 [shape = 'u8[393216]{0}', space=vmem, size = 0x60000, scoped, tag = 'input window, operand 5, single buffered']
    #allocation12 [shape = 'u8[8192]{0}', space=vmem, size = 0x2000, scoped, tag = 'input window, operand 7, single buffered']
    #allocation13 [shape = 's32[1]{0}', space=sflag, size = 0x4, scoped, tag = 'scoped memory for tpu_custom_call.1']
    #allocation14 [shape = 'u8[4096]{0}', space=vmem, size = 0x1000, scoped, tag = 'output window, operand 0, single buffered']
    %15 = vsyncpa [#allocation4], 0
    %16 = vsyncpa [#allocation7], 0
    %17 = vsyncpa [#allocation10], 0
    %18 = vsyncpa [#allocation13], 0
    %19 = vsyncpa [#allocation5], 0
    // Predicated region
    $region2: #{tpu_custom_call.1} parent=1 // pred_check
      _
    $region3: #{tpu_custom_call.1} parent=1 // pred_check_branch
      %21 = sbr.rel (0) target = $region5
    $region4: #{tpu_custom_call.1} parent=1 // pred_region
      %23 = vsyncadd [#allocation4], 0
      %s25 = sshll.u32 %s0, 4
      %s26 = int_to_ptr.hbm [resolvable:$true] %s25
      %s27 = sshll.u32 [#allocation3], 4
      %s28 = int_to_ptr.vmem [resolvable:$true] %s27
      %30 = dma.hbm_to_vmem [thread:$0]  %s26, 128, %s28, [#allocation4]
    $region5: #{tpu_custom_call.1} parent=1 // pred_fallthru
      _
    // Predicated region
    $region6: #{tpu_custom_call.1} parent=1 // pred_check
      _
    $region7: #{tpu_custom_call.1} parent=1 // pred_check_branch
      %32 = sbr.rel (0) target = $region9
    $region8: #{tpu_custom_call.1} parent=1 // pred_region
      %34 = vsyncadd [#allocation7], 0
      %s35 = sshll.u32 %s1, 4
      %s36 = int_to_ptr.hbm [resolvable:$true] %s35
      %s37 = sshll.u32 [#allocation6], 4
      %s38 = int_to_ptr.vmem [resolvable:$true] %s37
      %43 = dma.hbm_to_vmem [thread:$0]  %s36, 1792, %s38, [#allocation7], 448, 448, 28
    $region9: #{tpu_custom_call.1} parent=1 // pred_fallthru
      _
    // Predicated region
    $region10: #{tpu_custom_call.1} parent=1 // pred_check
      _
    $region11: #{tpu_custom_call.1} parent=1 // pred_check_branch
      %45 = sbr.rel (0) target = $region13
    $region12: #{tpu_custom_call.1} parent=1 // pred_region
      %47 = vsyncadd [#allocation7], 0
      %s49 = sshll.u32 %s2, 4
      %s50 = int_to_ptr.hbm [resolvable:$true] %s49
      %s51 = sshll.u32 [#allocation8], 4
      %s52 = int_to_ptr.vmem [resolvable:$true] %s51
      %54 = dma.hbm_to_vmem [thread:$0]  %s50, 112, %s52, [#allocation7]
    $region13: #{tpu_custom_call.1} parent=1 // pred_fallthru
      _
    // Predicated region
    $region14: #{tpu_custom_call.1} parent=1 // pred_check
      _
    $region15: #{tpu_custom_call.1} parent=1 // pred_check_branch
      %56 = sbr.rel (0) target = $region17
    $region16: #{tpu_custom_call.1} parent=1 // pred_region
      %58 = vsyncadd [#allocation10], 0
      %s59 = sshll.u32 %s3, 4
      %s60 = int_to_ptr.hbm [resolvable:$true] %s59
      %s61 = sshll.u32 [#allocation9], 4
      %s62 = int_to_ptr.vmem [resolvable:$true] %s61
      %67 = dma.hbm_to_vmem [thread:$0]  %s60, 12288, %s62, [#allocation10], 192, 192, 12
    $region17: #{tpu_custom_call.1} parent=1 // pred_fallthru
      _
    // Predicated region
    $region18: #{tpu_custom_call.1} parent=1 // pred_check
      _
    $region19: #{tpu_custom_call.1} parent=1 // pred_check_branch
      %69 = sbr.rel (0) target = $region21
    $region20: #{tpu_custom_call.1} parent=1 // pred_region
      _
    $region21: #{tpu_custom_call.1} parent=1 // pred_fallthru
      _
    // Predicated region
    $region22: #{tpu_custom_call.1} parent=1 // pred_check
      _
    $region23: #{tpu_custom_call.1} parent=1 // pred_check_branch
      %71 = sbr.rel (0) target = $region25
    $region24: #{tpu_custom_call.1} parent=1 // pred_region
      %73 = vsyncadd [#allocation10], 0
      %s74 = sshll.u32 %s5, 4
      %s75 = int_to_ptr.hbm [resolvable:$true] %s74
      %s76 = sshll.u32 [#allocation11], 4
      %s77 = int_to_ptr.vmem [resolvable:$true] %s76
      %82 = dma.hbm_to_vmem [thread:$0]  %s75, 12288, %s77, [#allocation10], 128, 128, 8
    $region25: #{tpu_custom_call.1} parent=1 // pred_fallthru
      _
    // Predicated region
    $region26: #{tpu_custom_call.1} parent=1 // pred_check
      _
    $region27: #{tpu_custom_call.1} parent=1 // pred_check_branch
      %84 = sbr.rel (0) target = $region29
    $region28: #{tpu_custom_call.1} parent=1 // pred_region
      _
    $region29: #{tpu_custom_call.1} parent=1 // pred_fallthru
      _
    // Predicated region
    $region30: #{tpu_custom_call.1} parent=1 // pred_check
      _
    $region31: #{tpu_custom_call.1} parent=1 // pred_check_branch
      %86 = sbr.rel (0) target = $region33
    $region32: #{tpu_custom_call.1} parent=1 // pred_region
      %88 = vsyncadd [#allocation13], 0
      %s90 = sshll.u32 %s7, 4
      %s91 = int_to_ptr.hbm [resolvable:$true] %s90
      %s92 = sshll.u32 [#allocation12], 4
      %s93 = int_to_ptr.vmem [resolvable:$true] %s92
      %95 = dma.hbm_to_vmem [thread:$0]  %s91, 256, %s93, [#allocation13]
    $region33: #{tpu_custom_call.1} parent=1 // pred_fallthru
      _
    // Predicated region
    $region34: #{tpu_custom_call.1} parent=1 // pred_check
      _
    $region35: #{tpu_custom_call.1} parent=1 // pred_check_branch
      %97 = sbr.rel (0) target = $region37
    $region36: #{tpu_custom_call.1} parent=1 // pred_region
      _
    $region37: #{tpu_custom_call.1} parent=1 // pred_fallthru
      _
    // Predicated region
    $region38: #{tpu_custom_call.1} parent=1 // pred_check
      _
    $region39: #{tpu_custom_call.1} parent=1 // pred_check_branch
      %99 = sbr.rel (0) target = $region41
    $region40: #{tpu_custom_call.1} parent=1 // pred_region
      %101 = dma.done [#allocation4], 128
    $region41: #{tpu_custom_call.1} parent=1 // pred_fallthru
      _
    // Predicated region
    $region42: #{tpu_custom_call.1} parent=1 // pred_check
      _
    $region43: #{tpu_custom_call.1} parent=1 // pred_check_branch
      %103 = sbr.rel (0) target = $region45
    $region44: #{tpu_custom_call.1} parent=1 // pred_region
      %105 = dma.done [#allocation7], 1792
    $region45: #{tpu_custom_call.1} parent=1 // pred_fallthru
      _
    // Predicated region
    $region46: #{tpu_custom_call.1} parent=1 // pred_check
      _
    $region47: #{tpu_custom_call.1} parent=1 // pred_check_branch
      %107 = sbr.rel (0) target = $region49
    $region48: #{tpu_custom_call.1} parent=1 // pred_region
      %109 = dma.done [#allocation7], 112
    $region49: #{tpu_custom_call.1} parent=1 // pred_fallthru
      _
    // Predicated region
    $region50: #{tpu_custom_call.1} parent=1 // pred_check
      _
    $region51: #{tpu_custom_call.1} parent=1 // pred_check_branch
      %111 = sbr.rel (0) target = $region53
    $region52: #{tpu_custom_call.1} parent=1 // pred_region
      %113 = dma.done [#allocation10], 12288
    $region53: #{tpu_custom_call.1} parent=1 // pred_fallthru
      _
    // Predicated region
    $region54: #{tpu_custom_call.1} parent=1 // pred_check
      _
    $region55: #{tpu_custom_call.1} parent=1 // pred_check_branch
      %115 = sbr.rel (0) target = $region57
    $region56: #{tpu_custom_call.1} parent=1 // pred_region
      %117 = dma.done [#allocation10], 12288
    $region57: #{tpu_custom_call.1} parent=1 // pred_fallthru
      _
    // Predicated region
    $region58: #{tpu_custom_call.1} parent=1 // pred_check
      _
    $region59: #{tpu_custom_call.1} parent=1 // pred_check_branch
      %119 = sbr.rel (0) target = $region61
    $region60: #{tpu_custom_call.1} parent=1 // pred_region
      %121 = dma.done [#allocation13], 256
    $region61: #{tpu_custom_call.1} parent=1 // pred_fallthru
      _
    %v123 = vld [vmem:[#allocation3] sm:$0xff]
    %v124 = vpack.c.bf16 %v123, %v123
    %v125 = vld [vmem:[#allocation6] sm:$0xff]
    %v126 = vld [vmem:[#allocation6 + $0x8] sm:$0xff]
    %v127 = vld [vmem:[#allocation6 + $0x10] sm:$0xff]
    %v128 = vld [vmem:[#allocation6 + $0x18] sm:$0xf]
    %v129 = vld [vmem:[#allocation6 + $0x1c] sm:$0xff]
    %v130 = vld [vmem:[#allocation6 + $0x24] sm:$0xff]
    %v131 = vld [vmem:[#allocation6 + $0x2c] sm:$0xff]
    %v132 = vld [vmem:[#allocation6 + $0x34] sm:$0xf]
    %v133 = vld [vmem:[#allocation6 + $0x38] sm:$0xff]
    %v134 = vld [vmem:[#allocation6 + $0x40] sm:$0xff]
    %v135 = vld [vmem:[#allocation6 + $0x48] sm:$0xff]
    %v136 = vld [vmem:[#allocation6 + $0x50] sm:$0xf]
    %v137 = vld [vmem:[#allocation6 + $0x54] sm:$0xff]
    %v138 = vld [vmem:[#allocation6 + $0x5c] sm:$0xff]
    %v139 = vld [vmem:[#allocation6 + $0x64] sm:$0xff]
    %v140 = vld [vmem:[#allocation6 + $0x6c] sm:$0xf]
    %v141 = vld [vmem:[#allocation8] sm:$0xff]
    %v143 = vperm.slane %v141, 0
    %v144 = vperm.slane %v141, 1
    %v145 = vperm.slane %v141, 2
    %v146 = vperm.slane %v141, 3
    %v147 = vperm.slane %v141, 4
    %v148 = vperm.slane %v141, 5
    %v149 = vperm.slane %v141, 6
    %v173 = vunpack.c.l.b16 %v125
    %v174 = vunpack.c.h.b16 %v125
    %v175 = vunpack.c.l.b16 %v126
    %v176 = vunpack.c.h.b16 %v126
    %v177 = vunpack.c.l.b16 %v127
    %v178 = vunpack.c.h.b16 %v127
    %v179 = vunpack.c.l.b16 %v128
    %v180 = vunpack.c.l.b16 %v129
    %v181 = vunpack.c.h.b16 %v129
    %v182 = vunpack.c.l.b16 %v130
    %v183 = vunpack.c.h.b16 %v130
    %v184 = vunpack.c.l.b16 %v131
    %v185 = vunpack.c.h.b16 %v131
    %v186 = vunpack.c.l.b16 %v132
    %v187 = vunpack.c.l.b16 %v133
    %v188 = vunpack.c.h.b16 %v133
    %v189 = vunpack.c.l.b16 %v134
    %v190 = vunpack.c.h.b16 %v134
    %v191 = vunpack.c.l.b16 %v135
    %v192 = vunpack.c.h.b16 %v135
    %v193 = vunpack.c.l.b16 %v136
    %v194 = vunpack.c.l.b16 %v137
    %v195 = vunpack.c.h.b16 %v137
    %v196 = vunpack.c.l.b16 %v138
    %v197 = vunpack.c.h.b16 %v138
    %v198 = vunpack.c.l.b16 %v139
    %v199 = vunpack.c.h.b16 %v139
    %v200 = vunpack.c.l.b16 %v140
    %v201 = vpack.c.b16 %v180, %v173
    %v202 = vpack.c.b16 %v181, %v174
    %v203 = vpack.c.b16 %v182, %v175
    %v204 = vpack.c.b16 %v183, %v176
    %v205 = vpack.c.b16 %v184, %v177
    %v206 = vpack.c.b16 %v185, %v178
    %v207 = vpack.c.b16 %v186, %v179
    %v208 = vpack.c.b16 %v194, %v187
    %v209 = vpack.c.b16 %v195, %v188
    %v210 = vpack.c.b16 %v196, %v189
    %v211 = vpack.c.b16 %v197, %v190
    %v212 = vpack.c.b16 %v198, %v191
    %v213 = vpack.c.b16 %v199, %v192
    %v214 = vpack.c.b16 %v200, %v193
    %vm229 = vcmask 261120
    %v231 = vsel %vm229, %v124, 0
    %233 = vmatpush.bf16.msra.mxu0 0
    %234 = vmatpush.bf16.msra.mxu0 0
    %235 = vmatpush.bf16.msra.mxu0 0
    %236 = vmatpush.bf16.msra.mxu0 0
    %237 = vmatpush.bf16.msra.mxu0 0
    %238 = vmatpush.bf16.msra.mxu0 0
    %239 = vmatpush.bf16.msra.mxu0 %v208
    %240 = vmatpush.bf16.msra.mxu0 %v201
    %241 = vmatmul.bf16.gmra.mxu0 %v231
    %v242 = vpop.f32.mrf.mxu0
    %v243 = vadd.f32 %v143, %v242
    %v244 = vpop.f32.mrf.mxu0
    %245 = vdwg.mxu0
    %246 = vmatpush.bf16.msra.mxu0 0
    %247 = vmatpush.bf16.msra.mxu0 0
    %248 = vmatpush.bf16.msra.mxu0 0
    %249 = vmatpush.bf16.msra.mxu0 0
    %250 = vmatpush.bf16.msra.mxu0 0
    %251 = vmatpush.bf16.msra.mxu0 0
    %252 = vmatpush.bf16.msra.mxu0 %v209
    %253 = vmatpush.bf16.msra.mxu0 %v202
    %254 = vmatmul.bf16.gmra.mxu0 %v231
    %v255 = vpop.f32.mrf.mxu0
    %v256 = vadd.f32 %v144, %v255
    %v257 = vpop.f32.mrf.mxu0
    %258 = vdwg.mxu0
    %259 = vmatpush.bf16.msra.mxu0 0
    %260 = vmatpush.bf16.msra.mxu0 0
    %261 = vmatpush.bf16.msra.mxu0 0
    %262 = vmatpush.bf16.msra.mxu0 0
    %263 = vmatpush.bf16.msra.mxu0 0
    %264 = vmatpush.bf16.msra.mxu0 0
    %265 = vmatpush.bf16.msra.mxu0 %v210
    %266 = vmatpush.bf16.msra.mxu0 %v203
    %267 = vmatmul.bf16.gmra.mxu0 %v231
    %v268 = vpop.f32.mrf.mxu0
    %v269 = vadd.f32 %v145, %v268
    %v270 = vpop.f32.mrf.mxu0
    %271 = vdwg.mxu0
    %272 = vmatpush.bf16.msra.mxu0 0
    %273 = vmatpush.bf16.msra.mxu0 0
    %274 = vmatpush.bf16.msra.mxu0 0
    %275 = vmatpush.bf16.msra.mxu0 0
    %276 = vmatpush.bf16.msra.mxu0 0
    %277 = vmatpush.bf16.msra.mxu0 0
    %278 = vmatpush.bf16.msra.mxu0 %v211
    %279 = vmatpush.bf16.msra.mxu0 %v204
    %280 = vmatmul.bf16.gmra.mxu0 %v231
    %v281 = vpop.f32.mrf.mxu0
    %v282 = vadd.f32 %v146, %v281
    %v283 = vpop.f32.mrf.mxu0
    %284 = vdwg.mxu0
    %285 = vmatpush.bf16.msra.mxu0 0
    %286 = vmatpush.bf16.msra.mxu0 0
    %287 = vmatpush.bf16.msra.mxu0 0
    %288 = vmatpush.bf16.msra.mxu0 0
    %289 = vmatpush.bf16.msra.mxu0 0
    %290 = vmatpush.bf16.msra.mxu0 0
    %291 = vmatpush.bf16.msra.mxu0 %v212
    %292 = vmatpush.bf16.msra.mxu0 %v205
    %293 = vmatmul.bf16.gmra.mxu0 %v231
    %v294 = vpop.f32.mrf.mxu0
    %v295 = vadd.f32 %v147, %v294
    %v296 = vpop.f32.mrf.mxu0
    %297 = vdwg.mxu0
    %298 = vmatpush.bf16.msra.mxu0 0
    %299 = vmatpush.bf16.msra.mxu0 0
    %300 = vmatpush.bf16.msra.mxu0 0
    %301 = vmatpush.bf16.msra.mxu0 0
    %302 = vmatpush.bf16.msra.mxu0 0
    %303 = vmatpush.bf16.msra.mxu0 0
    %304 = vmatpush.bf16.msra.mxu0 %v213
    %305 = vmatpush.bf16.msra.mxu0 %v206
    %306 = vmatmul.bf16.gmra.mxu0 %v231
    %v307 = vpop.f32.mrf.mxu0
    %v308 = vadd.f32 %v148, %v307
    %v309 = vpop.f32.mrf.mxu0
    %310 = vdwg.mxu0
    %311 = vmatpush.bf16.msra.mxu0 0
    %312 = vmatpush.bf16.msra.mxu0 0
    %313 = vmatpush.bf16.msra.mxu0 0
    %314 = vmatpush.bf16.msra.mxu0 0
    %315 = vmatpush.bf16.msra.mxu0 0
    %316 = vmatpush.bf16.msra.mxu0 0
    %317 = vmatpush.bf16.msra.mxu0 %v214
    %318 = vmatpush.bf16.msra.mxu0 %v207
    %319 = vmatmul.bf16.gmra.mxu0 %v231
    %v320 = vpop.f32.mrf.mxu0
    %v321 = vadd.f32 %v149, %v320
    %v322 = vpop.f32.mrf.mxu0
    %323 = vdwg.mxu0
    %v324 = vmax.f32 %v243, 0.0
    %v325 = vmax.f32 %v256, 0.0
    %v326 = vmax.f32 %v269, 0.0
    %v327 = vmax.f32 %v282, 0.0
    %v328 = vmax.f32 %v295, 0.0
    %v329 = vmax.f32 %v308, 0.0
    %v330 = vmax.f32 %v321, 0.0
    %v331 = vpack.c.bf16 %v324, %v324
    %v332 = vpack.c.bf16 %v325, %v325
    %v333 = vpack.c.bf16 %v326, %v326
    %v334 = vpack.c.bf16 %v327, %v327
    %v335 = vld [vmem:[#allocation9] sm:$0xff]
    %v336 = vld [vmem:[#allocation9 + $0x8] sm:$0xf]
    %v337 = vld [vmem:[#allocation9 + $0xc] sm:$0xff]
    %v338 = vld [vmem:[#allocation9 + $0x14] sm:$0xf]
    %v339 = vld [vmem:[#allocation9 + $0x18] sm:$0xff]
    %v340 = vld [vmem:[#allocation9 + $0x20] sm:$0xf]
    %v341 = vld [vmem:[#allocation9 + $0x24] sm:$0xff]
    %v342 = vld [vmem:[#allocation9 + $0x2c] sm:$0xf]
    %v343 = vld [vmem:[#allocation9 + $0x30] sm:$0xff]
    %v344 = vld [vmem:[#allocation9 + $0x38] sm:$0xf]
    %v345 = vld [vmem:[#allocation9 + $0x3c] sm:$0xff]
    %v346 = vld [vmem:[#allocation9 + $0x44] sm:$0xf]
    %v347 = vld [vmem:[#allocation9 + $0x48] sm:$0xff]
    %v348 = vld [vmem:[#allocation9 + $0x50] sm:$0xf]
    %v349 = vld [vmem:[#allocation9 + $0x54] sm:$0xff]
    %v350 = vld [vmem:[#allocation9 + $0x5c] sm:$0xf]
    %v351 = vld [vmem:[#allocation9 + $0x60] sm:$0xff]
    %v352 = vld [vmem:[#allocation9 + $0x68] sm:$0xf]
    %v353 = vld [vmem:[#allocation9 + $0x6c] sm:$0xff]
    %v354 = vld [vmem:[#allocation9 + $0x74] sm:$0xf]
    %v355 = vld [vmem:[#allocation9 + $0x78] sm:$0xff]
    %v356 = vld [vmem:[#allocation9 + $0x80] sm:$0xf]
    %v357 = vld [vmem:[#allocation9 + $0x84] sm:$0xff]
    %v358 = vld [vmem:[#allocation9 + $0x8c] sm:$0xf]
    %v359 = vld [vmem:[#allocation9 + $0x90] sm:$0xff]
    %v360 = vld [vmem:[#allocation9 + $0x98] sm:$0xf]
    %v361 = vld [vmem:[#allocation9 + $0x9c] sm:$0xff]
    %v362 = vld [vmem:[#allocation9 + $0xa4] sm:$0xf]
    %v363 = vld [vmem:[#allocation9 + $0xa8] sm:$0xff]
    %v364 = vld [vmem:[#allocation9 + $0xb0] sm:$0xf]
    %v365 = vld [vmem:[#allocation9 + $0xb4] sm:$0xff]
    %v366 = vld [vmem:[#allocation9 + $0xbc] sm:$0xf]
    %v367 = vld [vmem:[#allocation9 + $0xc0] sm:$0xff]
    %v368 = vld [vmem:[#allocation9 + $0xc8] sm:$0xf]
    %v369 = vld [vmem:[#allocation9 + $0xcc] sm:$0xff]
    %v370 = vld [vmem:[#allocation9 + $0xd4] sm:$0xf]
    %v371 = vld [vmem:[#allocation9 + $0xd8] sm:$0xff]
    %v372 = vld [vmem:[#allocation9 + $0xe0] sm:$0xf]
    %v373 = vld [vmem:[#allocation9 + $0xe4] sm:$0xff]
    %v374 = vld [vmem:[#allocation9 + $0xec] sm:$0xf]
    %v375 = vld [vmem:[#allocation9 + $0xf0] sm:$0xff]
    %v376 = vld [vmem:[#allocation9 + $0xf8] sm:$0xf]
    %v377 = vld [vmem:[#allocation9 + $0xfc] sm:$0xff]
    %v378 = vld [vmem:[#allocation9 + $0x104] sm:$0xf]
    %v379 = vld [vmem:[#allocation9 + $0x108] sm:$0xff]
    %v380 = vld [vmem:[#allocation9 + $0x110] sm:$0xf]
    %v381 = vld [vmem:[#allocation9 + $0x114] sm:$0xff]
    %v382 = vld [vmem:[#allocation9 + $0x11c] sm:$0xf]
    %v383 = vld [vmem:[#allocation9 + $0x120] sm:$0xff]
    %v384 = vld [vmem:[#allocation9 + $0x128] sm:$0xf]
    %v385 = vld [vmem:[#allocation9 + $0x12c] sm:$0xff]
    %v386 = vld [vmem:[#allocation9 + $0x134] sm:$0xf]
    %v387 = vld [vmem:[#allocation9 + $0x138] sm:$0xff]
    %v388 = vld [vmem:[#allocation9 + $0x140] sm:$0xf]
    %v389 = vld [vmem:[#allocation9 + $0x144] sm:$0xff]
    %v390 = vld [vmem:[#allocation9 + $0x14c] sm:$0xf]
    %v391 = vld [vmem:[#allocation9 + $0x150] sm:$0xff]
    %v392 = vld [vmem:[#allocation9 + $0x158] sm:$0xf]
    %v393 = vld [vmem:[#allocation9 + $0x15c] sm:$0xff]
    %v394 = vld [vmem:[#allocation9 + $0x164] sm:$0xf]
    %v395 = vld [vmem:[#allocation9 + $0x168] sm:$0xff]
    %v396 = vld [vmem:[#allocation9 + $0x170] sm:$0xf]
    %v397 = vld [vmem:[#allocation9 + $0x174] sm:$0xff]
    %v398 = vld [vmem:[#allocation9 + $0x17c] sm:$0xf]
    %v399 = vld [vmem:[#allocation9 + $0x180] sm:$0xff]
    %v400 = vld [vmem:[#allocation9 + $0x188] sm:$0xf]
    %v401 = vld [vmem:[#allocation9 + $0x18c] sm:$0xff]
    %v402 = vld [vmem:[#allocation9 + $0x194] sm:$0xf]
    %v403 = vld [vmem:[#allocation9 + $0x198] sm:$0xff]
    %v404 = vld [vmem:[#allocation9 + $0x1a0] sm:$0xf]
    %v405 = vld [vmem:[#allocation9 + $0x1a4] sm:$0xff]
    %v406 = vld [vmem:[#allocation9 + $0x1ac] sm:$0xf]
    %v407 = vld [vmem:[#allocation9 + $0x1b0] sm:$0xff]
    %v408 = vld [vmem:[#allocation9 + $0x1b8] sm:$0xf]
    %v409 = vld [vmem:[#allocation9 + $0x1bc] sm:$0xff]
    %v410 = vld [vmem:[#allocation9 + $0x1c4] sm:$0xf]
    %v411 = vld [vmem:[#allocation9 + $0x1c8] sm:$0xff]
    %v412 = vld [vmem:[#allocation9 + $0x1d0] sm:$0xf]
    %v413 = vld [vmem:[#allocation9 + $0x1d4] sm:$0xff]
    %v414 = vld [vmem:[#allocation9 + $0x1dc] sm:$0xf]
    %v415 = vld [vmem:[#allocation9 + $0x1e0] sm:$0xff]
    %v416 = vld [vmem:[#allocation9 + $0x1e8] sm:$0xf]
    %v417 = vld [vmem:[#allocation9 + $0x1ec] sm:$0xff]
    %v418 = vld [vmem:[#allocation9 + $0x1f4] sm:$0xf]
    %v419 = vld [vmem:[#allocation9 + $0x1f8] sm:$0xff]
    %v420 = vld [vmem:[#allocation9 + $0x200] sm:$0xf]
    %v421 = vld [vmem:[#allocation9 + $0x204] sm:$0xff]
    %v422 = vld [vmem:[#allocation9 + $0x20c] sm:$0xf]
    %v423 = vld [vmem:[#allocation9 + $0x210] sm:$0xff]
    %v424 = vld [vmem:[#allocation9 + $0x218] sm:$0xf]
    %v425 = vld [vmem:[#allocation9 + $0x21c] sm:$0xff]
    %v426 = vld [vmem:[#allocation9 + $0x224] sm:$0xf]
    %v427 = vld [vmem:[#allocation9 + $0x228] sm:$0xff]
    %v428 = vld [vmem:[#allocation9 + $0x230] sm:$0xf]
    %v429 = vld [vmem:[#allocation9 + $0x234] sm:$0xff]
    %v430 = vld [vmem:[#allocation9 + $0x23c] sm:$0xf]
    %v431 = vld [vmem:[#allocation9 + $0x240] sm:$0xff]
    %v432 = vld [vmem:[#allocation9 + $0x248] sm:$0xf]
    %v433 = vld [vmem:[#allocation9 + $0x24c] sm:$0xff]
    %v434 = vld [vmem:[#allocation9 + $0x254] sm:$0xf]
    %v435 = vld [vmem:[#allocation9 + $0x258] sm:$0xff]
    %v436 = vld [vmem:[#allocation9 + $0x260] sm:$0xf]
    %v437 = vld [vmem:[#allocation9 + $0x264] sm:$0xff]
    %v438 = vld [vmem:[#allocation9 + $0x26c] sm:$0xf]
    %v439 = vld [vmem:[#allocation9 + $0x270] sm:$0xff]
    %v440 = vld [vmem:[#allocation9 + $0x278] sm:$0xf]
    %v441 = vld [vmem:[#allocation9 + $0x27c] sm:$0xff]
    %v442 = vld [vmem:[#allocation9 + $0x284] sm:$0xf]
    %v443 = vld [vmem:[#allocation9 + $0x288] sm:$0xff]
    %v444 = vld [vmem:[#allocation9 + $0x290] sm:$0xf]
    %v445 = vld [vmem:[#allocation9 + $0x294] sm:$0xff]
    %v446 = vld [vmem:[#allocation9 + $0x29c] sm:$0xf]
    %v447 = vld [vmem:[#allocation9 + $0x2a0] sm:$0xff]
    %v448 = vld [vmem:[#allocation9 + $0x2a8] sm:$0xf]
    %v449 = vld [vmem:[#allocation9 + $0x2ac] sm:$0xff]
    %v450 = vld [vmem:[#allocation9 + $0x2b4] sm:$0xf]
    %v451 = vld [vmem:[#allocation9 + $0x2b8] sm:$0xff]
    %v452 = vld [vmem:[#allocation9 + $0x2c0] sm:$0xf]
    %v453 = vld [vmem:[#allocation9 + $0x2c4] sm:$0xff]
    %v454 = vld [vmem:[#allocation9 + $0x2cc] sm:$0xf]
    %v455 = vld [vmem:[#allocation9 + $0x2d0] sm:$0xff]
    %v456 = vld [vmem:[#allocation9 + $0x2d8] sm:$0xf]
    %v457 = vld [vmem:[#allocation9 + $0x2dc] sm:$0xff]
    %v458 = vld [vmem:[#allocation9 + $0x2e4] sm:$0xf]
    %v459 = vld [vmem:[#allocation9 + $0x2e8] sm:$0xff]
    %v460 = vld [vmem:[#allocation9 + $0x2f0] sm:$0xf]
    %v461 = vld [vmem:[#allocation9 + $0x2f4] sm:$0xff]
    %v462 = vld [vmem:[#allocation9 + $0x2fc] sm:$0xf]
    %v463 = vld [vmem:[%s4] sm:$0x7]
    %v465 = vperm.slane %v463, 0
    %v466 = vperm.slane %v463, 1
    %v467 = vperm.slane %v463, 2
    %v599 = vunpack.c.l.b16 %v335
    %v600 = vunpack.c.h.b16 %v335
    %v601 = vunpack.c.l.b16 %v336
    %v602 = vunpack.c.l.b16 %v337
    %v603 = vunpack.c.h.b16 %v337
    %v604 = vunpack.c.l.b16 %v338
    %v605 = vunpack.c.l.b16 %v339
    %v606 = vunpack.c.h.b16 %v339
    %v607 = vunpack.c.l.b16 %v340
    %v608 = vunpack.c.l.b16 %v341
    %v609 = vunpack.c.h.b16 %v341
    %v610 = vunpack.c.l.b16 %v342
    %v611 = vunpack.c.l.b16 %v343
    %v612 = vunpack.c.h.b16 %v343
    %v613 = vunpack.c.l.b16 %v344
    %v614 = vunpack.c.l.b16 %v345
    %v615 = vunpack.c.h.b16 %v345
    %v616 = vunpack.c.l.b16 %v346
    %v617 = vunpack.c.l.b16 %v347
    %v618 = vunpack.c.h.b16 %v347
    %v619 = vunpack.c.l.b16 %v348
    %v620 = vunpack.c.l.b16 %v349
    %v621 = vunpack.c.h.b16 %v349
    %v622 = vunpack.c.l.b16 %v350
    %v623 = vunpack.c.l.b16 %v351
    %v624 = vunpack.c.h.b16 %v351
    %v625 = vunpack.c.l.b16 %v352
    %v626 = vunpack.c.l.b16 %v353
    %v627 = vunpack.c.h.b16 %v353
    %v628 = vunpack.c.l.b16 %v354
    %v629 = vunpack.c.l.b16 %v355
    %v630 = vunpack.c.h.b16 %v355
    %v631 = vunpack.c.l.b16 %v356
    %v632 = vunpack.c.l.b16 %v357
    %v633 = vunpack.c.h.b16 %v357
    %v634 = vunpack.c.l.b16 %v358
    %v635 = vunpack.c.l.b16 %v359
    %v636 = vunpack.c.h.b16 %v359
    %v637 = vunpack.c.l.b16 %v360
    %v638 = vunpack.c.l.b16 %v361
    %v639 = vunpack.c.h.b16 %v361
    %v640 = vunpack.c.l.b16 %v362
    %v641 = vunpack.c.l.b16 %v363
    %v642 = vunpack.c.h.b16 %v363
    %v643 = vunpack.c.l.b16 %v364
    %v644 = vunpack.c.l.b16 %v365
    %v645 = vunpack.c.h.b16 %v365
    %v646 = vunpack.c.l.b16 %v366
    %v647 = vunpack.c.l.b16 %v367
    %v648 = vunpack.c.h.b16 %v367
    %v649 = vunpack.c.l.b16 %v368
    %v650 = vunpack.c.l.b16 %v369
    %v651 = vunpack.c.h.b16 %v369
    %v652 = vunpack.c.l.b16 %v370
    %v653 = vunpack.c.l.b16 %v371
    %v654 = vunpack.c.h.b16 %v371
    %v655 = vunpack.c.l.b16 %v372
    %v656 = vunpack.c.l.b16 %v373
    %v657 = vunpack.c.h.b16 %v373
    %v658 = vunpack.c.l.b16 %v374
    %v659 = vunpack.c.l.b16 %v375
    %v660 = vunpack.c.h.b16 %v375
    %v661 = vunpack.c.l.b16 %v376
    %v662 = vunpack.c.l.b16 %v377
    %v663 = vunpack.c.h.b16 %v377
    %v664 = vunpack.c.l.b16 %v378
    %v665 = vunpack.c.l.b16 %v379
    %v666 = vunpack.c.h.b16 %v379
    %v667 = vunpack.c.l.b16 %v380
    %v668 = vunpack.c.l.b16 %v381
    %v669 = vunpack.c.h.b16 %v381
    %v670 = vunpack.c.l.b16 %v382
    %v671 = vunpack.c.l.b16 %v383
    %v672 = vunpack.c.h.b16 %v383
    %v673 = vunpack.c.l.b16 %v384
    %v674 = vunpack.c.l.b16 %v385
    %v675 = vunpack.c.h.b16 %v385
    %v676 = vunpack.c.l.b16 %v386
    %v677 = vunpack.c.l.b16 %v387
    %v678 = vunpack.c.h.b16 %v387
    %v679 = vunpack.c.l.b16 %v388
    %v680 = vunpack.c.l.b16 %v389
    %v681 = vunpack.c.h.b16 %v389
    %v682 = vunpack.c.l.b16 %v390
    %v683 = vunpack.c.l.b16 %v391
    %v684 = vunpack.c.h.b16 %v391
    %v685 = vunpack.c.l.b16 %v392
    %v686 = vunpack.c.l.b16 %v393
    %v687 = vunpack.c.h.b16 %v393
    %v688 = vunpack.c.l.b16 %v394
    %v689 = vunpack.c.l.b16 %v395
    %v690 = vunpack.c.h.b16 %v395
    %v691 = vunpack.c.l.b16 %v396
    %v692 = vunpack.c.l.b16 %v397
    %v693 = vunpack.c.h.b16 %v397
    %v694 = vunpack.c.l.b16 %v398
    %v695 = vunpack.c.l.b16 %v399
    %v696 = vunpack.c.h.b16 %v399
    %v697 = vunpack.c.l.b16 %v400
    %v698 = vunpack.c.l.b16 %v401
    %v699 = vunpack.c.h.b16 %v401
    %v700 = vunpack.c.l.b16 %v402
    %v701 = vunpack.c.l.b16 %v403
    %v702 = vunpack.c.h.b16 %v403
    %v703 = vunpack.c.l.b16 %v404
    %v704 = vunpack.c.l.b16 %v405
    %v705 = vunpack.c.h.b16 %v405
    %v706 = vunpack.c.l.b16 %v406
    %v707 = vunpack.c.l.b16 %v407
    %v708 = vunpack.c.h.b16 %v407
    %v709 = vunpack.c.l.b16 %v408
    %v710 = vunpack.c.l.b16 %v409
    %v711 = vunpack.c.h.b16 %v409
    %v712 = vunpack.c.l.b16 %v410
    %v713 = vunpack.c.l.b16 %v411
    %v714 = vunpack.c.h.b16 %v411
    %v715 = vunpack.c.l.b16 %v412
    %v716 = vunpack.c.l.b16 %v413
    %v717 = vunpack.c.h.b16 %v413
    %v718 = vunpack.c.l.b16 %v414
    %v719 = vunpack.c.l.b16 %v415
    %v720 = vunpack.c.h.b16 %v415
    %v721 = vunpack.c.l.b16 %v416
    %v722 = vunpack.c.l.b16 %v417
    %v723 = vunpack.c.h.b16 %v417
    %v724 = vunpack.c.l.b16 %v418
    %v725 = vunpack.c.l.b16 %v419
    %v726 = vunpack.c.h.b16 %v419
    %v727 = vunpack.c.l.b16 %v420
    %v728 = vunpack.c.l.b16 %v421
    %v729 = vunpack.c.h.b16 %v421
    %v730 = vunpack.c.l.b16 %v422
    %v731 = vunpack.c.l.b16 %v423
    %v732 = vunpack.c.h.b16 %v423
    %v733 = vunpack.c.l.b16 %v424
    %v734 = vunpack.c.l.b16 %v425
    %v735 = vunpack.c.h.b16 %v425
    %v736 = vunpack.c.l.b16 %v426
    %v737 = vunpack.c.l.b16 %v427
    %v738 = vunpack.c.h.b16 %v427
    %v739 = vunpack.c.l.b16 %v428
    %v740 = vunpack.c.l.b16 %v429
    %v741 = vunpack.c.h.b16 %v429
    %v742 = vunpack.c.l.b16 %v430
    %v743 = vunpack.c.l.b16 %v431
    %v744 = vunpack.c.h.b16 %v431
    %v745 = vunpack.c.l.b16 %v432
    %v746 = vunpack.c.l.b16 %v433
    %v747 = vunpack.c.h.b16 %v433
    %v748 = vunpack.c.l.b16 %v434
    %v749 = vunpack.c.l.b16 %v435
    %v750 = vunpack.c.h.b16 %v435
    %v751 = vunpack.c.l.b16 %v436
    %v752 = vunpack.c.l.b16 %v437
    %v753 = vunpack.c.h.b16 %v437
    %v754 = vunpack.c.l.b16 %v438
    %v755 = vunpack.c.l.b16 %v439
    %v756 = vunpack.c.h.b16 %v439
    %v757 = vunpack.c.l.b16 %v440
    %v758 = vunpack.c.l.b16 %v441
    %v759 = vunpack.c.h.b16 %v441
    %v760 = vunpack.c.l.b16 %v442
    %v761 = vunpack.c.l.b16 %v443
    %v762 = vunpack.c.h.b16 %v443
    %v763 = vunpack.c.l.b16 %v444
    %v764 = vunpack.c.l.b16 %v445
    %v765 = vunpack.c.h.b16 %v445
    %v766 = vunpack.c.l.b16 %v446
    %v767 = vunpack.c.l.b16 %v447
    %v768 = vunpack.c.h.b16 %v447
    %v769 = vunpack.c.l.b16 %v448
    %v770 = vunpack.c.l.b16 %v449
    %v771 = vunpack.c.h.b16 %v449
    %v772 = vunpack.c.l.b16 %v450
    %v773 = vunpack.c.l.b16 %v451
    %v774 = vunpack.c.h.b16 %v451
    %v775 = vunpack.c.l.b16 %v452
    %v776 = vunpack.c.l.b16 %v453
    %v777 = vunpack.c.h.b16 %v453
    %v778 = vunpack.c.l.b16 %v454
    %v779 = vunpack.c.l.b16 %v455
    %v780 = vunpack.c.h.b16 %v455
    %v781 = vunpack.c.l.b16 %v456
    %v782 = vunpack.c.l.b16 %v457
    %v783 = vunpack.c.h.b16 %v457
    %v784 = vunpack.c.l.b16 %v458
    %v785 = vunpack.c.l.b16 %v459
    %v786 = vunpack.c.h.b16 %v459
    %v787 = vunpack.c.l.b16 %v460
    %v788 = vunpack.c.l.b16 %v461
    %v789 = vunpack.c.h.b16 %v461
    %v790 = vunpack.c.l.b16 %v462
    %v791 = vpack.c.b16 %v602, %v599
    %v792 = vpack.c.b16 %v603, %v600
    %v793 = vpack.c.b16 %v604, %v601
    %v794 = vpack.c.b16 %v608, %v605
    %v795 = vpack.c.b16 %v609, %v606
    %v796 = vpack.c.b16 %v610, %v607
    %v797 = vpack.c.b16 %v614, %v611
    %v798 = vpack.c.b16 %v615, %v612
    %v799 = vpack.c.b16 %v616, %v613
    %v800 = vpack.c.b16 %v620, %v617
    %v801 = vpack.c.b16 %v621, %v618
    %v802 = vpack.c.b16 %v622, %v619
    %v803 = vpack.c.b16 %v626, %v623
    %v804 = vpack.c.b16 %v627, %v624
    %v805 = vpack.c.b16 %v628, %v625
    %v806 = vpack.c.b16 %v632, %v629
    %v807 = vpack.c.b16 %v633, %v630
    %v808 = vpack.c.b16 %v634, %v631
    %v809 = vpack.c.b16 %v638, %v635
    %v810 = vpack.c.b16 %v639, %v636
    %v811 = vpack.c.b16 %v640, %v637
    %v812 = vpack.c.b16 %v644, %v641
    %v813 = vpack.c.b16 %v645, %v642
    %v814 = vpack.c.b16 %v646, %v643
    %v815 = vpack.c.b16 %v650, %v647
    %v816 = vpack.c.b16 %v651, %v648
    %v817 = vpack.c.b16 %v652, %v649
    %v818 = vpack.c.b16 %v656, %v653
    %v819 = vpack.c.b16 %v657, %v654
    %v820 = vpack.c.b16 %v658, %v655
    %v821 = vpack.c.b16 %v662, %v659
    %v822 = vpack.c.b16 %v663, %v660
    %v823 = vpack.c.b16 %v664, %v661
    %v824 = vpack.c.b16 %v668, %v665
    %v825 = vpack.c.b16 %v669, %v666
    %v826 = vpack.c.b16 %v670, %v667
    %v827 = vpack.c.b16 %v674, %v671
    %v828 = vpack.c.b16 %v675, %v672
    %v829 = vpack.c.b16 %v676, %v673
    %v830 = vpack.c.b16 %v680, %v677
    %v831 = vpack.c.b16 %v681, %v678
    %v832 = vpack.c.b16 %v682, %v679
    %v833 = vpack.c.b16 %v686, %v683
    %v834 = vpack.c.b16 %v687, %v684
    %v835 = vpack.c.b16 %v688, %v685
    %v836 = vpack.c.b16 %v692, %v689
    %v837 = vpack.c.b16 %v693, %v690
    %v838 = vpack.c.b16 %v694, %v691
    %v839 = vpack.c.b16 %v698, %v695
    %v840 = vpack.c.b16 %v699, %v696
    %v841 = vpack.c.b16 %v700, %v697
    %v842 = vpack.c.b16 %v704, %v701
    %v843 = vpack.c.b16 %v705, %v702
    %v844 = vpack.c.b16 %v706, %v703
    %v845 = vpack.c.b16 %v710, %v707
    %v846 = vpack.c.b16 %v711, %v708
    %v847 = vpack.c.b16 %v712, %v709
    %v848 = vpack.c.b16 %v716, %v713
    %v849 = vpack.c.b16 %v717, %v714
    %v850 = vpack.c.b16 %v718, %v715
    %v851 = vpack.c.b16 %v722, %v719
    %v852 = vpack.c.b16 %v723, %v720
    %v853 = vpack.c.b16 %v724, %v721
    %v854 = vpack.c.b16 %v728, %v725
    %v855 = vpack.c.b16 %v729, %v726
    %v856 = vpack.c.b16 %v730, %v727
    %v857 = vpack.c.b16 %v734, %v731
    %v858 = vpack.c.b16 %v735, %v732
    %v859 = vpack.c.b16 %v736, %v733
    %v860 = vpack.c.b16 %v740, %v737
    %v861 = vpack.c.b16 %v741, %v738
    %v862 = vpack.c.b16 %v742, %v739
    %v863 = vpack.c.b16 %v746, %v743
    %v864 = vpack.c.b16 %v747, %v744
    %v865 = vpack.c.b16 %v748, %v745
    %v866 = vpack.c.b16 %v752, %v749
    %v867 = vpack.c.b16 %v753, %v750
    %v868 = vpack.c.b16 %v754, %v751
    %v869 = vpack.c.b16 %v758, %v755
    %v870 = vpack.c.b16 %v759, %v756
    %v871 = vpack.c.b16 %v760, %v757
    %v872 = vpack.c.b16 %v764, %v761
    %v873 = vpack.c.b16 %v765, %v762
    %v874 = vpack.c.b16 %v766, %v763
    %v875 = vpack.c.b16 %v770, %v767
    %v876 = vpack.c.b16 %v771, %v768
    %v877 = vpack.c.b16 %v772, %v769
    %v878 = vpack.c.b16 %v776, %v773
    %v879 = vpack.c.b16 %v777, %v774
    %v880 = vpack.c.b16 %v778, %v775
    %v881 = vpack.c.b16 %v782, %v779
    %v882 = vpack.c.b16 %v783, %v780
    %v883 = vpack.c.b16 %v784, %v781
    %v884 = vpack.c.b16 %v788, %v785
    %v885 = vpack.c.b16 %v789, %v786
    %v886 = vpack.c.b16 %v790, %v787
    %983 = vmatpush.bf16.msra.mxu0 %v812
    %984 = vmatpush.bf16.msra.mxu0 %v809
    %985 = vmatpush.bf16.msra.mxu0 %v806
    %986 = vmatpush.bf16.msra.mxu0 %v803
    %987 = vmatpush.bf16.msra.mxu0 %v800
    %988 = vmatpush.bf16.msra.mxu0 %v797
    %989 = vmatpush.bf16.msra.mxu0 %v794
    %990 = vmatpush.bf16.msra.mxu0 %v791
    %991 = vmatmul.bf16.gmra.mxu0 %v331
    %v992 = vpop.f32.mrf.mxu0
    %v993 = vadd.f32 %v465, %v992
    %v994 = vpop.f32.mrf.mxu0
    %995 = vdwg.mxu0
    %996 = vmatpush.bf16.msra.mxu0 %v836
    %997 = vmatpush.bf16.msra.mxu0 %v833
    %998 = vmatpush.bf16.msra.mxu0 %v830
    %999 = vmatpush.bf16.msra.mxu0 %v827
    %1000 = vmatpush.bf16.msra.mxu0 %v824
    %1001 = vmatpush.bf16.msra.mxu0 %v821
    %1002 = vmatpush.bf16.msra.mxu0 %v818
    %1003 = vmatpush.bf16.msra.mxu0 %v815
    %1004 = vmatmul.bf16.gmra.mxu0 %v332
    %v1005 = vpop.f32.mrf.mxu0
    %v1006 = vadd.f32 %v993, %v1005
    %v1007 = vpop.f32.mrf.mxu0
    %1008 = vdwg.mxu0
    %1009 = vmatpush.bf16.msra.mxu0 %v860
    %1010 = vmatpush.bf16.msra.mxu0 %v857
    %1011 = vmatpush.bf16.msra.mxu0 %v854
    %1012 = vmatpush.bf16.msra.mxu0 %v851
    %1013 = vmatpush.bf16.msra.mxu0 %v848
    %1014 = vmatpush.bf16.msra.mxu0 %v845
    %1015 = vmatpush.bf16.msra.mxu0 %v842
    %1016 = vmatpush.bf16.msra.mxu0 %v839
    %1017 = vmatmul.bf16.gmra.mxu0 %v333
    %v1018 = vpop.f32.mrf.mxu0
    %v1019 = vadd.f32 %v1006, %v1018
    %v1020 = vpop.f32.mrf.mxu0
    %1021 = vdwg.mxu0
    %1022 = vmatpush.bf16.msra.mxu0 %v884
    %1023 = vmatpush.bf16.msra.mxu0 %v881
    %1024 = vmatpush.bf16.msra.mxu0 %v878
    %1025 = vmatpush.bf16.msra.mxu0 %v875
    %1026 = vmatpush.bf16.msra.mxu0 %v872
    %1027 = vmatpush.bf16.msra.mxu0 %v869
    %1028 = vmatpush.bf16.msra.mxu0 %v866
    %1029 = vmatpush.bf16.msra.mxu0 %v863
    %1030 = vmatmul.bf16.gmra.mxu0 %v334
    %v1031 = vpop.f32.mrf.mxu0
    %v1032 = vadd.f32 %v1019, %v1031
    %v1033 = vpop.f32.mrf.mxu0
    %1034 = vdwg.mxu0
    %1035 = vmatpush.bf16.msra.mxu0 %v813
    %1036 = vmatpush.bf16.msra.mxu0 %v810
    %1037 = vmatpush.bf16.msra.mxu0 %v807
    %1038 = vmatpush.bf16.msra.mxu0 %v804
    %1039 = vmatpush.bf16.msra.mxu0 %v801
    %1040 = vmatpush.bf16.msra.mxu0 %v798
    %1041 = vmatpush.bf16.msra.mxu0 %v795
    %1042 = vmatpush.bf16.msra.mxu0 %v792
    %1043 = vmatmul.bf16.gmra.mxu0 %v331
    %v1044 = vpop.f32.mrf.mxu0
    %v1045 = vadd.f32 %v466, %v1044
    %v1046 = vpop.f32.mrf.mxu0
    %1047 = vdwg.mxu0
    %1048 = vmatpush.bf16.msra.mxu0 %v837
    %1049 = vmatpush.bf16.msra.mxu0 %v834
    %1050 = vmatpush.bf16.msra.mxu0 %v831
    %1051 = vmatpush.bf16.msra.mxu0 %v828
    %1052 = vmatpush.bf16.msra.mxu0 %v825
    %1053 = vmatpush.bf16.msra.mxu0 %v822
    %1054 = vmatpush.bf16.msra.mxu0 %v819
    %1055 = vmatpush.bf16.msra.mxu0 %v816
    %1056 = vmatmul.bf16.gmra.mxu0 %v332
    %v1057 = vpop.f32.mrf.mxu0
    %v1058 = vadd.f32 %v1045, %v1057
    %v1059 = vpop.f32.mrf.mxu0
    %1060 = vdwg.mxu0
    %1061 = vmatpush.bf16.msra.mxu0 %v861
    %1062 = vmatpush.bf16.msra.mxu0 %v858
    %1063 = vmatpush.bf16.msra.mxu0 %v855
    %1064 = vmatpush.bf16.msra.mxu0 %v852
    %1065 = vmatpush.bf16.msra.mxu0 %v849
    %1066 = vmatpush.bf16.msra.mxu0 %v846
    %1067 = vmatpush.bf16.msra.mxu0 %v843
    %1068 = vmatpush.bf16.msra.mxu0 %v840
    %1069 = vmatmul.bf16.gmra.mxu0 %v333
    %v1070 = vpop.f32.mrf.mxu0
    %v1071 = vadd.f32 %v1058, %v1070
    %v1072 = vpop.f32.mrf.mxu0
    %1073 = vdwg.mxu0
    %1074 = vmatpush.bf16.msra.mxu0 %v885
    %1075 = vmatpush.bf16.msra.mxu0 %v882
    %1076 = vmatpush.bf16.msra.mxu0 %v879
    %1077 = vmatpush.bf16.msra.mxu0 %v876
    %1078 = vmatpush.bf16.msra.mxu0 %v873
    %1079 = vmatpush.bf16.msra.mxu0 %v870
    %1080 = vmatpush.bf16.msra.mxu0 %v867
    %1081 = vmatpush.bf16.msra.mxu0 %v864
    %1082 = vmatmul.bf16.gmra.mxu0 %v334
    %v1083 = vpop.f32.mrf.mxu0
    %v1084 = vadd.f32 %v1071, %v1083
    %v1085 = vpop.f32.mrf.mxu0
    %1086 = vdwg.mxu0
    %1087 = vmatpush.bf16.msra.mxu0 %v814
    %1088 = vmatpush.bf16.msra.mxu0 %v811
    %1089 = vmatpush.bf16.msra.mxu0 %v808
    %1090 = vmatpush.bf16.msra.mxu0 %v805
    %1091 = vmatpush.bf16.msra.mxu0 %v802
    %1092 = vmatpush.bf16.msra.mxu0 %v799
    %1093 = vmatpush.bf16.msra.mxu0 %v796
    %1094 = vmatpush.bf16.msra.mxu0 %v793
    %1095 = vmatmul.bf16.gmra.mxu0 %v331
    %v1096 = vpop.f32.mrf.mxu0
    %v1097 = vadd.f32 %v467, %v1096
    %v1098 = vpop.f32.mrf.mxu0
    %1099 = vdwg.mxu0
    %1100 = vmatpush.bf16.msra.mxu0 %v838
    %1101 = vmatpush.bf16.msra.mxu0 %v835
    %1102 = vmatpush.bf16.msra.mxu0 %v832
    %1103 = vmatpush.bf16.msra.mxu0 %v829
    %1104 = vmatpush.bf16.msra.mxu0 %v826
    %1105 = vmatpush.bf16.msra.mxu0 %v823
    %1106 = vmatpush.bf16.msra.mxu0 %v820
    %1107 = vmatpush.bf16.msra.mxu0 %v817
    %1108 = vmatmul.bf16.gmra.mxu0 %v332
    %v1109 = vpop.f32.mrf.mxu0
    %v1110 = vadd.f32 %v1097, %v1109
    %v1111 = vpop.f32.mrf.mxu0
    %1112 = vdwg.mxu0
    %1113 = vmatpush.bf16.msra.mxu0 %v862
    %1114 = vmatpush.bf16.msra.mxu0 %v859
    %1115 = vmatpush.bf16.msra.mxu0 %v856
    %1116 = vmatpush.bf16.msra.mxu0 %v853
    %1117 = vmatpush.bf16.msra.mxu0 %v850
    %1118 = vmatpush.bf16.msra.mxu0 %v847
    %1119 = vmatpush.bf16.msra.mxu0 %v844
    %1120 = vmatpush.bf16.msra.mxu0 %v841
    %1121 = vmatmul.bf16.gmra.mxu0 %v333
    %v1122 = vpop.f32.mrf.mxu0
    %v1123 = vadd.f32 %v1110, %v1122
    %v1124 = vpop.f32.mrf.mxu0
    %1125 = vdwg.mxu0
    %1126 = vmatpush.bf16.msra.mxu0 %v886
    %1127 = vmatpush.bf16.msra.mxu0 %v883
    %1128 = vmatpush.bf16.msra.mxu0 %v880
    %1129 = vmatpush.bf16.msra.mxu0 %v877
    %1130 = vmatpush.bf16.msra.mxu0 %v874
    %1131 = vmatpush.bf16.msra.mxu0 %v871
    %1132 = vmatpush.bf16.msra.mxu0 %v868
    %1133 = vmatpush.bf16.msra.mxu0 %v865
    %1134 = vmatmul.bf16.gmra.mxu0 %v334
    %v1135 = vpop.f32.mrf.mxu0
    %v1136 = vadd.f32 %v1123, %v1135
    %v1137 = vpop.f32.mrf.mxu0
    %1138 = vdwg.mxu0
    %v1139 = vmax.f32 %v1032, 0.0
    %v1140 = vmax.f32 %v1084, 0.0
    %v1141 = vmax.f32 %v1136, 0.0
    %v1142 = vpack.c.bf16 %v1140, %v1139
    %v1143 = vpack.c.bf16 %v1141, %v1141
    %v1144 = vpack.c.bf16 %v329, %v328
    %v1145 = vpack.c.bf16 %v330, %v330
    %v1148 = vunpack.c.l.b16 %v1142
    %v1149 = vunpack.c.h.b16 %v1142
    %v1150 = vunpack.c.l.b16 %v1143
    %v1151 = vpack.c.b16 %v1148, %v1148
    %v1152 = vpack.c.b16 %v1149, %v1149
    %v1153 = vpack.c.b16 %v1150, %v1150
    %v1159 = vunpack.c.l.b16 %v1144
    %v1160 = vunpack.c.h.b16 %v1144
    %v1161 = vunpack.c.l.b16 %v1145
    %v1162 = vpack.c.b16 %v1159, %v1159
    %v1163 = vpack.c.b16 %v1160, %v1160
    %v1164 = vpack.c.b16 %v1161, %v1161
    %v1168 = vld [vmem:[#allocation11] sm:$0xff]
    %v1169 = vld [vmem:[#allocation11 + $0x8] sm:$0xff]
    %v1170 = vld [vmem:[#allocation11 + $0x10] sm:$0xff]
    %v1171 = vld [vmem:[#allocation11 + $0x18] sm:$0xff]
    %v1172 = vld [vmem:[#allocation11 + $0x20] sm:$0xff]
    %v1173 = vld [vmem:[#allocation11 + $0x28] sm:$0xff]
    %v1174 = vld [vmem:[#allocation11 + $0x30] sm:$0xff]
    %v1175 = vld [vmem:[#allocation11 + $0x38] sm:$0xff]
    %v1176 = vld [vmem:[#allocation11 + $0x40] sm:$0xff]
    %v1177 = vld [vmem:[#allocation11 + $0x48] sm:$0xff]
    %v1178 = vld [vmem:[#allocation11 + $0x50] sm:$0xff]
    %v1179 = vld [vmem:[#allocation11 + $0x58] sm:$0xff]
    %v1180 = vld [vmem:[#allocation11 + $0x60] sm:$0xff]
    %v1181 = vld [vmem:[#allocation11 + $0x68] sm:$0xff]
    %v1182 = vld [vmem:[#allocation11 + $0x70] sm:$0xff]
    %v1183 = vld [vmem:[#allocation11 + $0x78] sm:$0xff]
    %v1184 = vld [vmem:[#allocation11 + $0x80] sm:$0xff]
    %v1185 = vld [vmem:[#allocation11 + $0x88] sm:$0xff]
    %v1186 = vld [vmem:[#allocation11 + $0x90] sm:$0xff]
    %v1187 = vld [vmem:[#allocation11 + $0x98] sm:$0xff]
    %v1188 = vld [vmem:[#allocation11 + $0xa0] sm:$0xff]
    %v1189 = vld [vmem:[#allocation11 + $0xa8] sm:$0xff]
    %v1190 = vld [vmem:[#allocation11 + $0xb0] sm:$0xff]
    %v1191 = vld [vmem:[#allocation11 + $0xb8] sm:$0xff]
    %v1192 = vld [vmem:[#allocation11 + $0xc0] sm:$0xff]
    %v1193 = vld [vmem:[#allocation11 + $0xc8] sm:$0xff]
    %v1194 = vld [vmem:[#allocation11 + $0xd0] sm:$0xff]
    %v1195 = vld [vmem:[#allocation11 + $0xd8] sm:$0xff]
    %v1196 = vld [vmem:[#allocation11 + $0xe0] sm:$0xff]
    %v1197 = vld [vmem:[#allocation11 + $0xe8] sm:$0xff]
    %v1198 = vld [vmem:[#allocation11 + $0xf0] sm:$0xff]
    %v1199 = vld [vmem:[#allocation11 + $0xf8] sm:$0xff]
    %v1200 = vld [vmem:[#allocation11 + $0x100] sm:$0xff]
    %v1201 = vld [vmem:[#allocation11 + $0x108] sm:$0xff]
    %v1202 = vld [vmem:[#allocation11 + $0x110] sm:$0xff]
    %v1203 = vld [vmem:[#allocation11 + $0x118] sm:$0xff]
    %v1204 = vld [vmem:[#allocation11 + $0x120] sm:$0xff]
    %v1205 = vld [vmem:[#allocation11 + $0x128] sm:$0xff]
    %v1206 = vld [vmem:[#allocation11 + $0x130] sm:$0xff]
    %v1207 = vld [vmem:[#allocation11 + $0x138] sm:$0xff]
    %v1208 = vld [vmem:[#allocation11 + $0x140] sm:$0xff]
    %v1209 = vld [vmem:[#allocation11 + $0x148] sm:$0xff]
    %v1210 = vld [vmem:[#allocation11 + $0x150] sm:$0xff]
    %v1211 = vld [vmem:[#allocation11 + $0x158] sm:$0xff]
    %v1212 = vld [vmem:[#allocation11 + $0x160] sm:$0xff]
    %v1213 = vld [vmem:[#allocation11 + $0x168] sm:$0xff]
    %v1214 = vld [vmem:[#allocation11 + $0x170] sm:$0xff]
    %v1215 = vld [vmem:[#allocation11 + $0x178] sm:$0xff]
    %v1216 = vld [vmem:[#allocation11 + $0x180] sm:$0xff]
    %v1217 = vld [vmem:[#allocation11 + $0x188] sm:$0xff]
    %v1218 = vld [vmem:[#allocation11 + $0x190] sm:$0xff]
    %v1219 = vld [vmem:[#allocation11 + $0x198] sm:$0xff]
    %v1220 = vld [vmem:[#allocation11 + $0x1a0] sm:$0xff]
    %v1221 = vld [vmem:[#allocation11 + $0x1a8] sm:$0xff]
    %v1222 = vld [vmem:[#allocation11 + $0x1b0] sm:$0xff]
    %v1223 = vld [vmem:[#allocation11 + $0x1b8] sm:$0xff]
    %v1224 = vld [vmem:[#allocation11 + $0x1c0] sm:$0xff]
    %v1225 = vld [vmem:[#allocation11 + $0x1c8] sm:$0xff]
    %v1226 = vld [vmem:[#allocation11 + $0x1d0] sm:$0xff]
    %v1227 = vld [vmem:[#allocation11 + $0x1d8] sm:$0xff]
    %v1228 = vld [vmem:[#allocation11 + $0x1e0] sm:$0xff]
    %v1229 = vld [vmem:[#allocation11 + $0x1e8] sm:$0xff]
    %v1230 = vld [vmem:[#allocation11 + $0x1f0] sm:$0xff]
    %v1231 = vld [vmem:[#allocation11 + $0x1f8] sm:$0xff]
    %v1232 = vld [vmem:[#allocation11 + $0x200] sm:$0xff]
    %v1233 = vld [vmem:[#allocation11 + $0x208] sm:$0xff]
    %v1234 = vld [vmem:[#allocation11 + $0x210] sm:$0xff]
    %v1235 = vld [vmem:[#allocation11 + $0x218] sm:$0xff]
    %v1236 = vld [vmem:[#allocation11 + $0x220] sm:$0xff]
    %v1237 = vld [vmem:[#allocation11 + $0x228] sm:$0xff]
    %v1238 = vld [vmem:[#allocation11 + $0x230] sm:$0xff]
    %v1239 = vld [vmem:[#allocation11 + $0x238] sm:$0xff]
    %v1240 = vld [vmem:[#allocation11 + $0x240] sm:$0xff]
    %v1241 = vld [vmem:[#allocation11 + $0x248] sm:$0xff]
    %v1242 = vld [vmem:[#allocation11 + $0x250] sm:$0xff]
    %v1243 = vld [vmem:[#allocation11 + $0x258] sm:$0xff]
    %v1244 = vld [vmem:[#allocation11 + $0x260] sm:$0xff]
    %v1245 = vld [vmem:[#allocation11 + $0x268] sm:$0xff]
    %v1246 = vld [vmem:[#allocation11 + $0x270] sm:$0xff]
    %v1247 = vld [vmem:[#allocation11 + $0x278] sm:$0xff]
    %v1248 = vld [vmem:[#allocation11 + $0x280] sm:$0xff]
    %v1249 = vld [vmem:[#allocation11 + $0x288] sm:$0xff]
    %v1250 = vld [vmem:[#allocation11 + $0x290] sm:$0xff]
    %v1251 = vld [vmem:[#allocation11 + $0x298] sm:$0xff]
    %v1252 = vld [vmem:[#allocation11 + $0x2a0] sm:$0xff]
    %v1253 = vld [vmem:[#allocation11 + $0x2a8] sm:$0xff]
    %v1254 = vld [vmem:[#allocation11 + $0x2b0] sm:$0xff]
    %v1255 = vld [vmem:[#allocation11 + $0x2b8] sm:$0xff]
    %v1256 = vld [vmem:[#allocation11 + $0x2c0] sm:$0xff]
    %v1257 = vld [vmem:[#allocation11 + $0x2c8] sm:$0xff]
    %v1258 = vld [vmem:[#allocation11 + $0x2d0] sm:$0xff]
    %v1259 = vld [vmem:[#allocation11 + $0x2d8] sm:$0xff]
    %v1260 = vld [vmem:[#allocation11 + $0x2e0] sm:$0xff]
    %v1261 = vld [vmem:[#allocation11 + $0x2e8] sm:$0xff]
    %v1262 = vld [vmem:[#allocation11 + $0x2f0] sm:$0xff]
    %v1263 = vld [vmem:[#allocation11 + $0x2f8] sm:$0xff]
    %v1264 = vld [vmem:[%s6] sm:$0x3]
    %v1266 = vperm.slane %v1264, 0
    %v1267 = vperm.slane %v1264, 1
    %v1366 = vunpack.c.l.b16 %v1168
    %v1367 = vunpack.c.h.b16 %v1168
    %v1368 = vunpack.c.l.b16 %v1169
    %v1369 = vunpack.c.h.b16 %v1169
    %v1370 = vunpack.c.l.b16 %v1170
    %v1371 = vunpack.c.h.b16 %v1170
    %v1372 = vunpack.c.l.b16 %v1171
    %v1373 = vunpack.c.h.b16 %v1171
    %v1374 = vunpack.c.l.b16 %v1172
    %v1375 = vunpack.c.h.b16 %v1172
    %v1376 = vunpack.c.l.b16 %v1173
    %v1377 = vunpack.c.h.b16 %v1173
    %v1378 = vunpack.c.l.b16 %v1174
    %v1379 = vunpack.c.h.b16 %v1174
    %v1380 = vunpack.c.l.b16 %v1175
    %v1381 = vunpack.c.h.b16 %v1175
    %v1382 = vunpack.c.l.b16 %v1176
    %v1383 = vunpack.c.h.b16 %v1176
    %v1384 = vunpack.c.l.b16 %v1177
    %v1385 = vunpack.c.h.b16 %v1177
    %v1386 = vunpack.c.l.b16 %v1178
    %v1387 = vunpack.c.h.b16 %v1178
    %v1388 = vunpack.c.l.b16 %v1179
    %v1389 = vunpack.c.h.b16 %v1179
    %v1390 = vunpack.c.l.b16 %v1180
    %v1391 = vunpack.c.h.b16 %v1180
    %v1392 = vunpack.c.l.b16 %v1181
    %v1393 = vunpack.c.h.b16 %v1181
    %v1394 = vunpack.c.l.b16 %v1182
    %v1395 = vunpack.c.h.b16 %v1182
    %v1396 = vunpack.c.l.b16 %v1183
    %v1397 = vunpack.c.h.b16 %v1183
    %v1398 = vunpack.c.l.b16 %v1184
    %v1399 = vunpack.c.h.b16 %v1184
    %v1400 = vunpack.c.l.b16 %v1185
    %v1401 = vunpack.c.h.b16 %v1185
    %v1402 = vunpack.c.l.b16 %v1186
    %v1403 = vunpack.c.h.b16 %v1186
    %v1404 = vunpack.c.l.b16 %v1187
    %v1405 = vunpack.c.h.b16 %v1187
    %v1406 = vunpack.c.l.b16 %v1188
    %v1407 = vunpack.c.h.b16 %v1188
    %v1408 = vunpack.c.l.b16 %v1189
    %v1409 = vunpack.c.h.b16 %v1189
    %v1410 = vunpack.c.l.b16 %v1190
    %v1411 = vunpack.c.h.b16 %v1190
    %v1412 = vunpack.c.l.b16 %v1191
    %v1413 = vunpack.c.h.b16 %v1191
    %v1414 = vunpack.c.l.b16 %v1192
    %v1415 = vunpack.c.h.b16 %v1192
    %v1416 = vunpack.c.l.b16 %v1193
    %v1417 = vunpack.c.h.b16 %v1193
    %v1418 = vunpack.c.l.b16 %v1194
    %v1419 = vunpack.c.h.b16 %v1194
    %v1420 = vunpack.c.l.b16 %v1195
    %v1421 = vunpack.c.h.b16 %v1195
    %v1422 = vunpack.c.l.b16 %v1196
    %v1423 = vunpack.c.h.b16 %v1196
    %v1424 = vunpack.c.l.b16 %v1197
    %v1425 = vunpack.c.h.b16 %v1197
    %v1426 = vunpack.c.l.b16 %v1198
    %v1427 = vunpack.c.h.b16 %v1198
    %v1428 = vunpack.c.l.b16 %v1199
    %v1429 = vunpack.c.h.b16 %v1199
    %v1430 = vunpack.c.l.b16 %v1200
    %v1431 = vunpack.c.h.b16 %v1200
    %v1432 = vunpack.c.l.b16 %v1201
    %v1433 = vunpack.c.h.b16 %v1201
    %v1434 = vunpack.c.l.b16 %v1202
    %v1435 = vunpack.c.h.b16 %v1202
    %v1436 = vunpack.c.l.b16 %v1203
    %v1437 = vunpack.c.h.b16 %v1203
    %v1438 = vunpack.c.l.b16 %v1204
    %v1439 = vunpack.c.h.b16 %v1204
    %v1440 = vunpack.c.l.b16 %v1205
    %v1441 = vunpack.c.h.b16 %v1205
    %v1442 = vunpack.c.l.b16 %v1206
    %v1443 = vunpack.c.h.b16 %v1206
    %v1444 = vunpack.c.l.b16 %v1207
    %v1445 = vunpack.c.h.b16 %v1207
    %v1446 = vunpack.c.l.b16 %v1208
    %v1447 = vunpack.c.h.b16 %v1208
    %v1448 = vunpack.c.l.b16 %v1209
    %v1449 = vunpack.c.h.b16 %v1209
    %v1450 = vunpack.c.l.b16 %v1210
    %v1451 = vunpack.c.h.b16 %v1210
    %v1452 = vunpack.c.l.b16 %v1211
    %v1453 = vunpack.c.h.b16 %v1211
    %v1454 = vunpack.c.l.b16 %v1212
    %v1455 = vunpack.c.h.b16 %v1212
    %v1456 = vunpack.c.l.b16 %v1213
    %v1457 = vunpack.c.h.b16 %v1213
    %v1458 = vunpack.c.l.b16 %v1214
    %v1459 = vunpack.c.h.b16 %v1214
    %v1460 = vunpack.c.l.b16 %v1215
    %v1461 = vunpack.c.h.b16 %v1215
    %v1462 = vunpack.c.l.b16 %v1216
    %v1463 = vunpack.c.h.b16 %v1216
    %v1464 = vunpack.c.l.b16 %v1217
    %v1465 = vunpack.c.h.b16 %v1217
    %v1466 = vunpack.c.l.b16 %v1218
    %v1467 = vunpack.c.h.b16 %v1218
    %v1468 = vunpack.c.l.b16 %v1219
    %v1469 = vunpack.c.h.b16 %v1219
    %v1470 = vunpack.c.l.b16 %v1220
    %v1471 = vunpack.c.h.b16 %v1220
    %v1472 = vunpack.c.l.b16 %v1221
    %v1473 = vunpack.c.h.b16 %v1221
    %v1474 = vunpack.c.l.b16 %v1222
    %v1475 = vunpack.c.h.b16 %v1222
    %v1476 = vunpack.c.l.b16 %v1223
    %v1477 = vunpack.c.h.b16 %v1223
    %v1478 = vunpack.c.l.b16 %v1224
    %v1479 = vunpack.c.h.b16 %v1224
    %v1480 = vunpack.c.l.b16 %v1225
    %v1481 = vunpack.c.h.b16 %v1225
    %v1482 = vunpack.c.l.b16 %v1226
    %v1483 = vunpack.c.h.b16 %v1226
    %v1484 = vunpack.c.l.b16 %v1227
    %v1485 = vunpack.c.h.b16 %v1227
    %v1486 = vunpack.c.l.b16 %v1228
    %v1487 = vunpack.c.h.b16 %v1228
    %v1488 = vunpack.c.l.b16 %v1229
    %v1489 = vunpack.c.h.b16 %v1229
    %v1490 = vunpack.c.l.b16 %v1230
    %v1491 = vunpack.c.h.b16 %v1230
    %v1492 = vunpack.c.l.b16 %v1231
    %v1493 = vunpack.c.h.b16 %v1231
    %v1494 = vunpack.c.l.b16 %v1232
    %v1495 = vunpack.c.h.b16 %v1232
    %v1496 = vunpack.c.l.b16 %v1233
    %v1497 = vunpack.c.h.b16 %v1233
    %v1498 = vunpack.c.l.b16 %v1234
    %v1499 = vunpack.c.h.b16 %v1234
    %v1500 = vunpack.c.l.b16 %v1235
    %v1501 = vunpack.c.h.b16 %v1235
    %v1502 = vunpack.c.l.b16 %v1236
    %v1503 = vunpack.c.h.b16 %v1236
    %v1504 = vunpack.c.l.b16 %v1237
    %v1505 = vunpack.c.h.b16 %v1237
    %v1506 = vunpack.c.l.b16 %v1238
    %v1507 = vunpack.c.h.b16 %v1238
    %v1508 = vunpack.c.l.b16 %v1239
    %v1509 = vunpack.c.h.b16 %v1239
    %v1510 = vunpack.c.l.b16 %v1240
    %v1511 = vunpack.c.h.b16 %v1240
    %v1512 = vunpack.c.l.b16 %v1241
    %v1513 = vunpack.c.h.b16 %v1241
    %v1514 = vunpack.c.l.b16 %v1242
    %v1515 = vunpack.c.h.b16 %v1242
    %v1516 = vunpack.c.l.b16 %v1243
    %v1517 = vunpack.c.h.b16 %v1243
    %v1518 = vunpack.c.l.b16 %v1244
    %v1519 = vunpack.c.h.b16 %v1244
    %v1520 = vunpack.c.l.b16 %v1245
    %v1521 = vunpack.c.h.b16 %v1245
    %v1522 = vunpack.c.l.b16 %v1246
    %v1523 = vunpack.c.h.b16 %v1246
    %v1524 = vunpack.c.l.b16 %v1247
    %v1525 = vunpack.c.h.b16 %v1247
    %v1526 = vunpack.c.l.b16 %v1248
    %v1527 = vunpack.c.h.b16 %v1248
    %v1528 = vunpack.c.l.b16 %v1249
    %v1529 = vunpack.c.h.b16 %v1249
    %v1530 = vunpack.c.l.b16 %v1250
    %v1531 = vunpack.c.h.b16 %v1250
    %v1532 = vunpack.c.l.b16 %v1251
    %v1533 = vunpack.c.h.b16 %v1251
    %v1534 = vunpack.c.l.b16 %v1252
    %v1535 = vunpack.c.h.b16 %v1252
    %v1536 = vunpack.c.l.b16 %v1253
    %v1537 = vunpack.c.h.b16 %v1253
    %v1538 = vunpack.c.l.b16 %v1254
    %v1539 = vunpack.c.h.b16 %v1254
    %v1540 = vunpack.c.l.b16 %v1255
    %v1541 = vunpack.c.h.b16 %v1255
    %v1542 = vunpack.c.l.b16 %v1256
    %v1543 = vunpack.c.h.b16 %v1256
    %v1544 = vunpack.c.l.b16 %v1257
    %v1545 = vunpack.c.h.b16 %v1257
    %v1546 = vunpack.c.l.b16 %v1258
    %v1547 = vunpack.c.h.b16 %v1258
    %v1548 = vunpack.c.l.b16 %v1259
    %v1549 = vunpack.c.h.b16 %v1259
    %v1550 = vunpack.c.l.b16 %v1260
    %v1551 = vunpack.c.h.b16 %v1260
    %v1552 = vunpack.c.l.b16 %v1261
    %v1553 = vunpack.c.h.b16 %v1261
    %v1554 = vunpack.c.l.b16 %v1262
    %v1555 = vunpack.c.h.b16 %v1262
    %v1556 = vunpack.c.l.b16 %v1263
    %v1557 = vunpack.c.h.b16 %v1263
    %v1558 = vpack.c.b16 %v1368, %v1366
    %v1559 = vpack.c.b16 %v1369, %v1367
    %v1560 = vpack.c.b16 %v1372, %v1370
    %v1561 = vpack.c.b16 %v1373, %v1371
    %v1562 = vpack.c.b16 %v1376, %v1374
    %v1563 = vpack.c.b16 %v1377, %v1375
    %v1564 = vpack.c.b16 %v1380, %v1378
    %v1565 = vpack.c.b16 %v1381, %v1379
    %v1566 = vpack.c.b16 %v1384, %v1382
    %v1567 = vpack.c.b16 %v1385, %v1383
    %v1568 = vpack.c.b16 %v1388, %v1386
    %v1569 = vpack.c.b16 %v1389, %v1387
    %v1570 = vpack.c.b16 %v1392, %v1390
    %v1571 = vpack.c.b16 %v1393, %v1391
    %v1572 = vpack.c.b16 %v1396, %v1394
    %v1573 = vpack.c.b16 %v1397, %v1395
    %v1574 = vpack.c.b16 %v1400, %v1398
    %v1575 = vpack.c.b16 %v1401, %v1399
    %v1576 = vpack.c.b16 %v1404, %v1402
    %v1577 = vpack.c.b16 %v1405, %v1403
    %v1578 = vpack.c.b16 %v1408, %v1406
    %v1579 = vpack.c.b16 %v1409, %v1407
    %v1580 = vpack.c.b16 %v1412, %v1410
    %v1581 = vpack.c.b16 %v1413, %v1411
    %v1582 = vpack.c.b16 %v1416, %v1414
    %v1583 = vpack.c.b16 %v1417, %v1415
    %v1584 = vpack.c.b16 %v1420, %v1418
    %v1585 = vpack.c.b16 %v1421, %v1419
    %v1586 = vpack.c.b16 %v1424, %v1422
    %v1587 = vpack.c.b16 %v1425, %v1423
    %v1588 = vpack.c.b16 %v1428, %v1426
    %v1589 = vpack.c.b16 %v1429, %v1427
    %v1590 = vpack.c.b16 %v1432, %v1430
    %v1591 = vpack.c.b16 %v1433, %v1431
    %v1592 = vpack.c.b16 %v1436, %v1434
    %v1593 = vpack.c.b16 %v1437, %v1435
    %v1594 = vpack.c.b16 %v1440, %v1438
    %v1595 = vpack.c.b16 %v1441, %v1439
    %v1596 = vpack.c.b16 %v1444, %v1442
    %v1597 = vpack.c.b16 %v1445, %v1443
    %v1598 = vpack.c.b16 %v1448, %v1446
    %v1599 = vpack.c.b16 %v1449, %v1447
    %v1600 = vpack.c.b16 %v1452, %v1450
    %v1601 = vpack.c.b16 %v1453, %v1451
    %v1602 = vpack.c.b16 %v1456, %v1454
    %v1603 = vpack.c.b16 %v1457, %v1455
    %v1604 = vpack.c.b16 %v1460, %v1458
    %v1605 = vpack.c.b16 %v1461, %v1459
    %v1606 = vpack.c.b16 %v1464, %v1462
    %v1607 = vpack.c.b16 %v1465, %v1463
    %v1608 = vpack.c.b16 %v1468, %v1466
    %v1609 = vpack.c.b16 %v1469, %v1467
    %v1610 = vpack.c.b16 %v1472, %v1470
    %v1611 = vpack.c.b16 %v1473, %v1471
    %v1612 = vpack.c.b16 %v1476, %v1474
    %v1613 = vpack.c.b16 %v1477, %v1475
    %v1614 = vpack.c.b16 %v1480, %v1478
    %v1615 = vpack.c.b16 %v1481, %v1479
    %v1616 = vpack.c.b16 %v1484, %v1482
    %v1617 = vpack.c.b16 %v1485, %v1483
    %v1618 = vpack.c.b16 %v1488, %v1486
    %v1619 = vpack.c.b16 %v1489, %v1487
    %v1620 = vpack.c.b16 %v1492, %v1490
    %v1621 = vpack.c.b16 %v1493, %v1491
    %v1622 = vpack.c.b16 %v1496, %v1494
    %v1623 = vpack.c.b16 %v1497, %v1495
    %v1624 = vpack.c.b16 %v1500, %v1498
    %v1625 = vpack.c.b16 %v1501, %v1499
    %v1626 = vpack.c.b16 %v1504, %v1502
    %v1627 = vpack.c.b16 %v1505, %v1503
    %v1628 = vpack.c.b16 %v1508, %v1506
    %v1629 = vpack.c.b16 %v1509, %v1507
    %v1630 = vpack.c.b16 %v1512, %v1510
    %v1631 = vpack.c.b16 %v1513, %v1511
    %v1632 = vpack.c.b16 %v1516, %v1514
    %v1633 = vpack.c.b16 %v1517, %v1515
    %v1634 = vpack.c.b16 %v1520, %v1518
    %v1635 = vpack.c.b16 %v1521, %v1519
    %v1636 = vpack.c.b16 %v1524, %v1522
    %v1637 = vpack.c.b16 %v1525, %v1523
    %v1638 = vpack.c.b16 %v1528, %v1526
    %v1639 = vpack.c.b16 %v1529, %v1527
    %v1640 = vpack.c.b16 %v1532, %v1530
    %v1641 = vpack.c.b16 %v1533, %v1531
    %v1642 = vpack.c.b16 %v1536, %v1534
    %v1643 = vpack.c.b16 %v1537, %v1535
    %v1644 = vpack.c.b16 %v1540, %v1538
    %v1645 = vpack.c.b16 %v1541, %v1539
    %v1646 = vpack.c.b16 %v1544, %v1542
    %v1647 = vpack.c.b16 %v1545, %v1543
    %v1648 = vpack.c.b16 %v1548, %v1546
    %v1649 = vpack.c.b16 %v1549, %v1547
    %v1650 = vpack.c.b16 %v1552, %v1550
    %v1651 = vpack.c.b16 %v1553, %v1551
    %v1652 = vpack.c.b16 %v1556, %v1554
    %v1653 = vpack.c.b16 %v1557, %v1555
    %1750 = vmatpush.bf16.msra.mxu0 %v1572
    %1751 = vmatpush.bf16.msra.mxu0 %v1570
    %1752 = vmatpush.bf16.msra.mxu0 %v1568
    %1753 = vmatpush.bf16.msra.mxu0 %v1566
    %1754 = vmatpush.bf16.msra.mxu0 %v1564
    %1755 = vmatpush.bf16.msra.mxu0 %v1562
    %1756 = vmatpush.bf16.msra.mxu0 %v1560
    %1757 = vmatpush.bf16.msra.mxu0 %v1558
    %1758 = vmatmul.bf16.gmra.mxu0 %v1151
    %v1759 = vpop.f32.mrf.mxu0
    %v1760 = vadd.f32 %v1266, %v1759
    %v1761 = vpop.f32.mrf.mxu0
    %1762 = vdwg.mxu0
    %1763 = vmatpush.bf16.msra.mxu0 %v1588
    %1764 = vmatpush.bf16.msra.mxu0 %v1586
    %1765 = vmatpush.bf16.msra.mxu0 %v1584
    %1766 = vmatpush.bf16.msra.mxu0 %v1582
    %1767 = vmatpush.bf16.msra.mxu0 %v1580
    %1768 = vmatpush.bf16.msra.mxu0 %v1578
    %1769 = vmatpush.bf16.msra.mxu0 %v1576
    %1770 = vmatpush.bf16.msra.mxu0 %v1574
    %1771 = vmatmul.bf16.gmra.mxu0 %v1152
    %v1772 = vpop.f32.mrf.mxu0
    %v1773 = vadd.f32 %v1760, %v1772
    %v1774 = vpop.f32.mrf.mxu0
    %1775 = vdwg.mxu0
    %1776 = vmatpush.bf16.msra.mxu0 %v1604
    %1777 = vmatpush.bf16.msra.mxu0 %v1602
    %1778 = vmatpush.bf16.msra.mxu0 %v1600
    %1779 = vmatpush.bf16.msra.mxu0 %v1598
    %1780 = vmatpush.bf16.msra.mxu0 %v1596
    %1781 = vmatpush.bf16.msra.mxu0 %v1594
    %1782 = vmatpush.bf16.msra.mxu0 %v1592
    %1783 = vmatpush.bf16.msra.mxu0 %v1590
    %1784 = vmatmul.bf16.gmra.mxu0 %v1153
    %v1785 = vpop.f32.mrf.mxu0
    %v1786 = vadd.f32 %v1773, %v1785
    %v1787 = vpop.f32.mrf.mxu0
    %1788 = vdwg.mxu0
    %1789 = vmatpush.bf16.msra.mxu0 %v1620
    %1790 = vmatpush.bf16.msra.mxu0 %v1618
    %1791 = vmatpush.bf16.msra.mxu0 %v1616
    %1792 = vmatpush.bf16.msra.mxu0 %v1614
    %1793 = vmatpush.bf16.msra.mxu0 %v1612
    %1794 = vmatpush.bf16.msra.mxu0 %v1610
    %1795 = vmatpush.bf16.msra.mxu0 %v1608
    %1796 = vmatpush.bf16.msra.mxu0 %v1606
    %1797 = vmatmul.bf16.gmra.mxu0 %v1162
    %v1798 = vpop.f32.mrf.mxu0
    %v1799 = vadd.f32 %v1786, %v1798
    %v1800 = vpop.f32.mrf.mxu0
    %1801 = vdwg.mxu0
    %1802 = vmatpush.bf16.msra.mxu0 %v1636
    %1803 = vmatpush.bf16.msra.mxu0 %v1634
    %1804 = vmatpush.bf16.msra.mxu0 %v1632
    %1805 = vmatpush.bf16.msra.mxu0 %v1630
    %1806 = vmatpush.bf16.msra.mxu0 %v1628
    %1807 = vmatpush.bf16.msra.mxu0 %v1626
    %1808 = vmatpush.bf16.msra.mxu0 %v1624
    %1809 = vmatpush.bf16.msra.mxu0 %v1622
    %1810 = vmatmul.bf16.gmra.mxu0 %v1163
    %v1811 = vpop.f32.mrf.mxu0
    %v1812 = vadd.f32 %v1799, %v1811
    %v1813 = vpop.f32.mrf.mxu0
    %1814 = vdwg.mxu0
    %1815 = vmatpush.bf16.msra.mxu0 %v1652
    %1816 = vmatpush.bf16.msra.mxu0 %v1650
    %1817 = vmatpush.bf16.msra.mxu0 %v1648
    %1818 = vmatpush.bf16.msra.mxu0 %v1646
    %1819 = vmatpush.bf16.msra.mxu0 %v1644
    %1820 = vmatpush.bf16.msra.mxu0 %v1642
    %1821 = vmatpush.bf16.msra.mxu0 %v1640
    %1822 = vmatpush.bf16.msra.mxu0 %v1638
    %1823 = vmatmul.bf16.gmra.mxu0 %v1164
    %v1824 = vpop.f32.mrf.mxu0
    %v1825 = vadd.f32 %v1812, %v1824
    %v1826 = vpop.f32.mrf.mxu0
    %1827 = vdwg.mxu0
    %1828 = vmatpush.bf16.msra.mxu0 %v1573
    %1829 = vmatpush.bf16.msra.mxu0 %v1571
    %1830 = vmatpush.bf16.msra.mxu0 %v1569
    %1831 = vmatpush.bf16.msra.mxu0 %v1567
    %1832 = vmatpush.bf16.msra.mxu0 %v1565
    %1833 = vmatpush.bf16.msra.mxu0 %v1563
    %1834 = vmatpush.bf16.msra.mxu0 %v1561
    %1835 = vmatpush.bf16.msra.mxu0 %v1559
    %1836 = vmatmul.bf16.gmra.mxu0 %v1151
    %v1837 = vpop.f32.mrf.mxu0
    %v1838 = vadd.f32 %v1267, %v1837
    %v1839 = vpop.f32.mrf.mxu0
    %1840 = vdwg.mxu0
    %1841 = vmatpush.bf16.msra.mxu0 %v1589
    %1842 = vmatpush.bf16.msra.mxu0 %v1587
    %1843 = vmatpush.bf16.msra.mxu0 %v1585
    %1844 = vmatpush.bf16.msra.mxu0 %v1583
    %1845 = vmatpush.bf16.msra.mxu0 %v1581
    %1846 = vmatpush.bf16.msra.mxu0 %v1579
    %1847 = vmatpush.bf16.msra.mxu0 %v1577
    %1848 = vmatpush.bf16.msra.mxu0 %v1575
    %1849 = vmatmul.bf16.gmra.mxu0 %v1152
    %v1850 = vpop.f32.mrf.mxu0
    %v1851 = vadd.f32 %v1838, %v1850
    %v1852 = vpop.f32.mrf.mxu0
    %1853 = vdwg.mxu0
    %1854 = vmatpush.bf16.msra.mxu0 %v1605
    %1855 = vmatpush.bf16.msra.mxu0 %v1603
    %1856 = vmatpush.bf16.msra.mxu0 %v1601
    %1857 = vmatpush.bf16.msra.mxu0 %v1599
    %1858 = vmatpush.bf16.msra.mxu0 %v1597
    %1859 = vmatpush.bf16.msra.mxu0 %v1595
    %1860 = vmatpush.bf16.msra.mxu0 %v1593
    %1861 = vmatpush.bf16.msra.mxu0 %v1591
    %1862 = vmatmul.bf16.gmra.mxu0 %v1153
    %v1863 = vpop.f32.mrf.mxu0
    %v1864 = vadd.f32 %v1851, %v1863
    %v1865 = vpop.f32.mrf.mxu0
    %1866 = vdwg.mxu0
    %1867 = vmatpush.bf16.msra.mxu0 %v1621
    %1868 = vmatpush.bf16.msra.mxu0 %v1619
    %1869 = vmatpush.bf16.msra.mxu0 %v1617
    %1870 = vmatpush.bf16.msra.mxu0 %v1615
    %1871 = vmatpush.bf16.msra.mxu0 %v1613
    %1872 = vmatpush.bf16.msra.mxu0 %v1611
    %1873 = vmatpush.bf16.msra.mxu0 %v1609
    %1874 = vmatpush.bf16.msra.mxu0 %v1607
    %1875 = vmatmul.bf16.gmra.mxu0 %v1162
    %v1876 = vpop.f32.mrf.mxu0
    %v1877 = vadd.f32 %v1864, %v1876
    %v1878 = vpop.f32.mrf.mxu0
    %1879 = vdwg.mxu0
    %1880 = vmatpush.bf16.msra.mxu0 %v1637
    %1881 = vmatpush.bf16.msra.mxu0 %v1635
    %1882 = vmatpush.bf16.msra.mxu0 %v1633
    %1883 = vmatpush.bf16.msra.mxu0 %v1631
    %1884 = vmatpush.bf16.msra.mxu0 %v1629
    %1885 = vmatpush.bf16.msra.mxu0 %v1627
    %1886 = vmatpush.bf16.msra.mxu0 %v1625
    %1887 = vmatpush.bf16.msra.mxu0 %v1623
    %1888 = vmatmul.bf16.gmra.mxu0 %v1163
    %v1889 = vpop.f32.mrf.mxu0
    %v1890 = vadd.f32 %v1877, %v1889
    %v1891 = vpop.f32.mrf.mxu0
    %1892 = vdwg.mxu0
    %1893 = vmatpush.bf16.msra.mxu0 %v1653
    %1894 = vmatpush.bf16.msra.mxu0 %v1651
    %1895 = vmatpush.bf16.msra.mxu0 %v1649
    %1896 = vmatpush.bf16.msra.mxu0 %v1647
    %1897 = vmatpush.bf16.msra.mxu0 %v1645
    %1898 = vmatpush.bf16.msra.mxu0 %v1643
    %1899 = vmatpush.bf16.msra.mxu0 %v1641
    %1900 = vmatpush.bf16.msra.mxu0 %v1639
    %1901 = vmatmul.bf16.gmra.mxu0 %v1164
    %v1902 = vpop.f32.mrf.mxu0
    %v1903 = vadd.f32 %v1890, %v1902
    %v1904 = vpop.f32.mrf.mxu0
    %1905 = vdwg.mxu0
    %v1906 = vmax.f32 %v1825, 0.0
    %v1907 = vmax.f32 %v1903, 0.0
    %v1908 = vld [vmem:[#allocation12] sm:$0xff]
    %v1909 = vld [vmem:[#allocation12 + $0x8] sm:$0xff]
    %s1910 = sld [smem:[#allocation2]]
    %v1911 = vstv %s1910
    %1912 = vmatpush.xpose.msra.mxu0 0.0
    %1913 = vmatpush.xpose.msra.mxu0 0.0
    %1914 = vmatpush.xpose.msra.mxu0 0.0
    %1915 = vmatpush.xpose.msra.mxu0 0.0
    %1916 = vmatpush.xpose.msra.mxu0 0.0
    %1917 = vmatpush.xpose.msra.mxu0 0.0
    %1918 = vmatpush.xpose.msra.mxu0 0.0
    %1919 = vmatpush.xpose.msra.mxu0 0.0
    %1920 = vmatpush.xpose.msra.mxu0 0.0
    %1921 = vmatpush.xpose.msra.mxu0 0.0
    %1922 = vmatpush.xpose.msra.mxu0 0.0
    %1923 = vmatpush.xpose.msra.mxu0 0.0
    %1924 = vmatpush.xpose.msra.mxu0 0.0
    %1925 = vmatpush.xpose.msra.mxu0 0.0
    %1926 = vmatpush.xpose.msra.mxu0 0.0
    %1927 = vmatpush.xpose.msra.mxu0 %v1906
    %1928 = vmatmul.f32.gmra.mxu0 %v1908
    %v1929 = vpop.f32.mrf.mxu0
    %v1930 = vadd.f32 %v1911, %v1929
    %1931 = vdwg.mxu0
    %1932 = vmatpush.xpose.msra.mxu0 0.0
    %1933 = vmatpush.xpose.msra.mxu0 0.0
    %1934 = vmatpush.xpose.msra.mxu0 0.0
    %1935 = vmatpush.xpose.msra.mxu0 0.0
    %1936 = vmatpush.xpose.msra.mxu0 0.0
    %1937 = vmatpush.xpose.msra.mxu0 0.0
    %1938 = vmatpush.xpose.msra.mxu0 0.0
    %1939 = vmatpush.xpose.msra.mxu0 0.0
    %1940 = vmatpush.xpose.msra.mxu0 0.0
    %1941 = vmatpush.xpose.msra.mxu0 0.0
    %1942 = vmatpush.xpose.msra.mxu0 0.0
    %1943 = vmatpush.xpose.msra.mxu0 0.0
    %1944 = vmatpush.xpose.msra.mxu0 0.0
    %1945 = vmatpush.xpose.msra.mxu0 0.0
    %1946 = vmatpush.xpose.msra.mxu0 0.0
    %1947 = vmatpush.xpose.msra.mxu0 %v1907
    %1948 = vmatmul.f32.gmra.mxu0 %v1909
    %v1949 = vpop.f32.mrf.mxu0
    %v1950 = vadd.f32 %v1930, %v1949
    %1951 = vdwg.mxu0
    %vm1952 = vcmask 64512
    %1953 = vst.msk [vmem:[#allocation14] sm:$0xff] %vm1952, %v1950
    // Predicated region
    $region62: #{tpu_custom_call.1} parent=1 // pred_check
      _
    $region63: #{tpu_custom_call.1} parent=1 // pred_check_branch
      %1955 = sbr.rel (0) target = $region65
    $region64: #{tpu_custom_call.1} parent=1 // pred_region
      %1957 = vsyncadd [#allocation5], 0
      %s1959 = sshll.u32 [#allocation14], 4
      %s1960 = int_to_ptr.vmem [resolvable:$true] %s1959
      %s1961 = sshll.u32 %s9, 4
      %s1962 = int_to_ptr.hbm [resolvable:$true] %s1961
      %1964 = dma.vmem_to_hbm [thread:$0]  %s1960, 128, %s1962, [#allocation5]
    $region65: #{tpu_custom_call.1} parent=1 // pred_fallthru
      _
    // Predicated region
    $region66: #{tpu_custom_call.1} parent=1 // pred_check
      _
    $region67: #{tpu_custom_call.1} parent=1 // pred_check_branch
      %1966 = sbr.rel (0) target = $region69
    $region68: #{tpu_custom_call.1} parent=1 // pred_region
      %1968 = dma.done [#allocation5], 128
    $region69: #{tpu_custom_call.1} parent=1 // pred_fallthru
      _
    %1969 = vsyncpa [#allocation4], 1
    %1970 = vsyncpa [#allocation7], 1
    %1971 = vsyncpa [#allocation10], 1
    %1972 = vsyncpa [#allocation13], 1
    %1973 = vsyncpa [#allocation5], 1

</llo_original>
